<compile_context>
chip_gen: v7x
topology: tpu7x:2x2x1
jax: 0.10.0
libtpu: 0.0.40
codegen_flags: <defaults>
</compile_context>

<pallas_src>
import functools

import jax
import jax.numpy as jnp
from jax.experimental import pallas as pl
from jax.experimental.pallas import tpu as pltpu

EPS = 1e-5  # PyTorch InstanceNorm2d default eps (affine=False, no running stats)


def _round_up(v, m):
    return (v + m - 1) // m * m


def _make_taps(x_dense, masks, *, W, HW_pad):
    """Build the 9 reflection-padded 3x3 conv taps of a lane-dense slab.

    x_dense: (C, HW_pad) value (f32 or bf16), row-major flattened spatial dim.
    Returns 9 arrays; taps[ky*3+kx][:, h*W+w] == x[:, refl(h+ky-1), refl(w+kx-1)].

    All shifts are pltpu.roll rotations along the lane axis plus jnp.where
    boundary fix-ups -- no (C, H, W) relayout, no lane-axis concatenates,
    no strided-slice copies.
    """
    first_row, last_row, first_col, last_col = masks

    # Value at row h-1 / h+1 (rolls are circular; edges fixed up below).
    row_above = pltpu.roll(x_dense, W, axis=1)            # x[p - W]
    row_below = pltpu.roll(x_dense, HW_pad - W, axis=1)   # x[p + W]
    row_m1 = jnp.where(first_row, row_below, row_above)   # refl(h-1)
    row_p1 = jnp.where(last_row, row_above, row_below)    # refl(h+1)

    taps = []
    for row in (row_m1, x_dense, row_p1):                 # ky = 0, 1, 2
        col_left = pltpu.roll(row, 1, axis=1)             # row[p - 1]
        col_right = pltpu.roll(row, HW_pad - 1, axis=1)   # row[p + 1]
        taps.append(jnp.where(first_col, col_right, col_left))   # kx = 0
        taps.append(row)                                           # kx = 1
        taps.append(jnp.where(last_col, col_left, col_right))     # kx = 2
    return taps


def _conv3x3_instancenorm(x_dense, w_ref, masks, valid, *, W, HW, HW_pad):
    """3x3 conv on a reflection-padded image + InstanceNorm2d(affine=False).

    x_dense: (C, HW_pad) value, dtype matching w_ref.
    w_ref:   (9, C, C) VMEM ref, w_ref[ky*3+kx, cout, cin].
    valid:   optional (C, HW_pad) bool mask of real (non-pad) spatial lanes.
    Returns (C, HW_pad) f32, instance-normalized.
    """
    taps = _make_taps(x_dense, masks, W=W, HW_pad=HW_pad)

    # 9 accumulated per-tap (C,C)@(C,HW_pad) matmuls into an f32 accumulator.
    # TODO(synk): on v6e/v7x with C>=128, stack tap pairs along the sublane
    # axis so the contraction K reaches the 256-deep MXU.
    acc = None
    for t in range(9):
        contrib = jnp.dot(w_ref[t], taps[t], preferred_element_type=jnp.float32)
        acc = contrib if acc is None else acc + contrib

    # Two-pass (centered) statistics: biased variance, matches PyTorch.
    inv_hw = 1.0 / HW
    if valid is None:
        mean = jnp.sum(acc, axis=1, keepdims=True) * inv_hw
        diff = acc - mean
        var = jnp.sum(diff * diff, axis=1, keepdims=True) * inv_hw
    else:
        mean = jnp.sum(jnp.where(valid, acc, 0.0), axis=1, keepdims=True) * inv_hw
        diff = acc - mean
        var = jnp.sum(jnp.where(valid, diff * diff, 0.0), axis=1,
                      keepdims=True) * inv_hw
    return diff * jax.lax.rsqrt(var + EPS)


def _residual_block_kernel(x_ref, w1_ref, w2_ref, out_ref, *,
                           H, W, HW_pad, compute_dtype):
    # x_ref / out_ref: (1, C, HW_pad) lane-dense blocks; w*_ref: (9, C, C).
    C = x_ref.shape[1]
    HW = H * W
    x2d = x_ref[0]                                             # (C, HW_pad) f32

    # Reflection-boundary masks, computed once and shared by both conv stages.
    p = jax.lax.broadcasted_iota(jnp.int32, (C, HW_pad), 1)
    col = p % W
    masks = (p < W,                        # h == 0
             (p >= HW - W) & (p < HW),     # h == H-1
             col == 0,                     # w == 0
             col == W - 1)                 # w == W-1
    valid = (p < HW) if HW_pad != HW else None

    h = _conv3x3_instancenorm(x2d.astype(compute_dtype), w1_ref, masks, valid,
                              W=W, HW=HW, HW_pad=HW_pad)       # stage 1
    h = jnp.maximum(h, 0.0)                                    # ReLU
    y = _conv3x3_instancenorm(h.astype(compute_dtype), w2_ref, masks, valid,
                              W=W, HW=HW, HW_pad=HW_pad)       # stage 2

    out_ref[...] = (x2d + y).reshape(1, C, HW_pad)             # residual add


@jax.jit
def residual_block_forward(x, w1, b1, w2, b2):
    """x: (N, C, H, W) f32; w*: (C, C, 3, 3); b*: (C,). Returns (N, C, H, W).

    b1/b2 are accepted for API parity with the PyTorch module but unused:
    a per-channel bias added before an affine-free InstanceNorm is exactly
    cancelled by the mean subtraction (the f32 reference keeps them and the
    outputs still match).
    """
    del b1, b2
    N, C, H, W = x.shape
    assert H >= 2 and W >= 2, "ReflectionPad2d(1) needs H, W >= 2"
    x = x.astype(jnp.float32)
    HW = H * W

    # bf16 MXU path once there is enough contraction work for it to matter;
    # f32 kept for tiny C so the 1e-4 accuracy check stays meaningful.
    use_bf16 = C >= 128
    compute_dtype = jnp.bfloat16 if use_bf16 else jnp.float32

    # Pad channels to the sublane granule and the flattened spatial dim to a
    # 128-lane multiple (full-width, unmasked loads/stores).  Zero weight
    # rows/cols and stats masking keep the math exact.
    # TODO(synk): for truly tiny C, skip the MXU and do the conv as 9
    # broadcast multiply-adds on the VPU instead of padding channels.
    C_pad = _round_up(C, 16 if use_bf16 else 8)
    HW_pad = _round_up(HW, 128)

    def prep_w(w):
        w = jnp.pad(w.astype(jnp.float32),
                    ((0, C_pad - C), (0, C_pad - C), (0, 0), (0, 0)))
        # OIHW -> (ky*3+kx, cout, cin): each tap is a clean (C_pad, C_pad) slab.
        w = jnp.transpose(w, (2, 3, 0, 1)).reshape(9, C_pad, C_pad)
        return w.astype(compute_dtype)

    w1t = prep_w(w1)
    w2t = prep_w(w2)

    x_flat = jnp.pad(x.reshape(N, C, HW),
                     ((0, 0), (0, C_pad - C), (0, HW_pad - HW)))

    kernel = functools.partial(_residual_block_kernel, H=H, W=W,
                               HW_pad=HW_pad, compute_dtype=compute_dtype)
    img_spec = pl.BlockSpec((1, C_pad, HW_pad), lambda n: (n, 0, 0))
    # Constant index_map -> weights stay resident across grid steps.
    # TODO(synk): for large C on v7x, use pipeline_mode=pl.Buffered(1) here to
    # avoid double-buffering the resident weight slabs.
    w_spec = pl.BlockSpec((9, C_pad, C_pad), lambda n: (0, 0, 0))

    # Explicit scoped-VMEM budget: in/out blocks double-buffered, resident
    # weights, and ~16 slab-sized in-kernel temporaries, with 50% headroom.
    w_bytes = 2 * 9 * C_pad * C_pad * (2 if use_bf16 else 4)
    slab_bytes = C_pad * HW_pad * 4
    vmem_bytes = int(1.5 * (4 * slab_bytes + 2 * w_bytes + 16 * slab_bytes))
    vmem_bytes = min(max(vmem_bytes, 16 * 1024 * 1024), 64 * 1024 * 1024)

    # TODO(synk): for large C*H*W (v7x 64 MiB VMEM) add a spatial grid axis:
    # tile H*W in >=512-lane chunks with a 1-row halo per conv stage,
    # accumulate InstanceNorm sums across tiles, then normalize in a 2nd pass.
    out_flat = pl.pallas_call(
        kernel,
        out_shape=jax.ShapeDtypeStruct((N, C_pad, HW_pad), jnp.float32),
        grid=(N,),
        in_specs=[img_spec, w_spec, w_spec],
        out_specs=img_spec,
        input_output_aliases={0: 0},   # write the result in place of x_flat
        compiler_params=pltpu.CompilerParams(
            dimension_semantics=("parallel",),
            vmem_limit_bytes=vmem_bytes),
    )(x_flat, w1t, w2t)

    return out_flat[:, :C, :HW].reshape(N, C, H, W)


def _reflect_pad_nchw(x):
    return jnp.pad(x, ((0, 0), (0, 0), (1, 1), (1, 1)), mode="reflect")


def _reference(x, w1, b1, w2, b2):
    """Pure-JAX reference matching PyTorch semantics (keeps the conv biases to
    show that dropping them in the kernel is equivalence-preserving)."""
    def conv_in(inp, w, b):
        xp = _reflect_pad_nchw(inp)
        y = jax.lax.conv_general_dilated(
            xp, w, (1, 1), "VALID",
            dimension_numbers=("NCHW", "OIHW", "NCHW"),
            precision=jax.lax.Precision.HIGHEST,
        ) + b.reshape(1, -1, 1, 1)
        mean = y.mean(axis=(2, 3), keepdims=True)
        var = ((y - mean) ** 2).mean(axis=(2, 3), keepdims=True)
        return (y - mean) * jax.lax.rsqrt(var + EPS)

    h = jnp.maximum(conv_in(x, w1, b1), 0.0)
    return x + conv_in(h, w2, b2)


if __name__ == "__main__":
    N, C, H, W = 2, 4, 16, 16
    key = jax.random.PRNGKey(0)
    k_x, k_w1, k_b1, k_w2, k_b2 = jax.random.split(key, 5)

    x = jax.random.normal(k_x, (N, C, H, W), dtype=jnp.float32)

    # Deterministic synthetic params (PyTorch-style uniform(-1/sqrt(fan_in), +)).
    fan_in = C * 3 * 3
    bound = 1.0 / (fan_in ** 0.5)
    w1 = jax.random.uniform(k_w1, (C, C, 3, 3), jnp.float32, -bound, bound)
    b1 = jax.random.uniform(k_b1, (C,), jnp.float32, -bound, bound)
    w2 = jax.random.uniform(k_w2, (C, C, 3, 3), jnp.float32, -bound, bound)
    b2 = jax.random.uniform(k_b2, (C,), jnp.float32, -bound, bound)

    out = jax.block_until_ready(residual_block_forward(x, w1, b1, w2, b2))
    ref = _reference(x, w1, b1, w2, b2)

    assert out.shape == (N, C, H, W) and out.dtype == jnp.float32
    assert jnp.allclose(out, ref, rtol=1e-4, atol=1e-4), "mismatch vs reference"

    print("KERNEL_OK")
</pallas_src>

<mosaic_0001>
module attributes {stable_mosaic.version = 11 : i64} {
  func.func @_residual_block_kernel(%arg0: i32, %arg1: memref<1x8x256xf32, #tpu.memory_space<vmem>>, %arg2: memref<9x8x8xf32, #tpu.memory_space<vmem>>, %arg3: memref<9x8x8xf32, #tpu.memory_space<vmem>>, %arg4: memref<1x8x256xf32, #tpu.memory_space<vmem>>) attributes {dimension_semantics = [#tpu.dimension_semantics<parallel>], iteration_bounds = array<i64: 2>, scalar_prefetch = 0 : i64, scratch_operands = 0 : i64, tpu.core_type = #tpu.core_type<tc>, window_params = [{transform_indices = @transform_0, window_bounds = array<i64: 1, 8, 256>}, {pipeline_mode = #tpu.pipeline_mode<synchronous>, transform_indices = @transform_1, window_bounds = array<i64: 9, 8, 8>}, {pipeline_mode = #tpu.pipeline_mode<synchronous>, transform_indices = @transform_2, window_bounds = array<i64: 9, 8, 8>}, {transform_indices = @transform_3, window_bounds = array<i64: 1, 8, 256>}]} {
    %c0 = arith.constant 0 : index
    %c0_0 = arith.constant 0 : index
    %c0_1 = arith.constant 0 : index
    %0 = vector.load %arg1[%c0, %c0_0, %c0_1] : memref<1x8x256xf32, #tpu.memory_space<vmem>>, vector<1x8x256xf32>
    %1 = vector.shape_cast %0 : vector<1x8x256xf32> to vector<8x256xf32>
    %2 = tpu.iota {dimensions = array<i32: 1>} : vector<8x256xi32>
    %c16_i32 = arith.constant 16 : i32
    %c0_i32 = arith.constant 0 : i32
    %3 = arith.cmpi eq, %c16_i32, %c0_i32 : i32
    %c1_i32 = arith.constant 1 : i32
    %4 = arith.select %3, %c1_i32, %c16_i32 : i32
    %5 = vector.broadcast %4 : i32 to vector<8x256xi32>
    %6 = arith.remsi %2, %5 : vector<8x256xi32>
    %c0_i32_2 = arith.constant 0 : i32
    %7 = vector.broadcast %c0_i32_2 : i32 to vector<8x256xi32>
    %8 = arith.cmpi ne, %6, %7 : vector<8x256xi32>
    %c0_i32_3 = arith.constant 0 : i32
    %9 = vector.broadcast %c0_i32_3 : i32 to vector<8x256xi32>
    %10 = arith.cmpi slt, %6, %9 : vector<8x256xi32>
    %c0_i32_4 = arith.constant 0 : i32
    %11 = arith.cmpi slt, %4, %c0_i32_4 : i32
    %12 = vector.broadcast %11 : i1 to vector<8x256xi1>
    %13 = vector.broadcast %12 : vector<8x256xi1> to vector<8x256xi1>
    %14 = arith.xori %10, %13 : vector<8x256xi1>
    %15 = arith.andi %14, %8 : vector<8x256xi1>
    %16 = vector.broadcast %4 : i32 to vector<8x256xi32>
    %17 = arith.addi %6, %16 : vector<8x256xi32>
    %18 = arith.select %15, %17, %6 : vector<8x256xi1>, vector<8x256xi32>
    %c16_i32_5 = arith.constant 16 : i32
    %19 = vector.broadcast %c16_i32_5 : i32 to vector<8x256xi32>
    %20 = arith.cmpi slt, %2, %19 : vector<8x256xi32>
    %c240_i32 = arith.constant 240 : i32
    %21 = vector.broadcast %c240_i32 : i32 to vector<8x256xi32>
    %22 = arith.cmpi sge, %2, %21 : vector<8x256xi32>
    %c256_i32 = arith.constant 256 : i32
    %23 = vector.broadcast %c256_i32 : i32 to vector<8x256xi32>
    %24 = arith.cmpi slt, %2, %23 : vector<8x256xi32>
    %25 = arith.andi %22, %24 : vector<8x256xi1>
    %c0_i32_6 = arith.constant 0 : i32
    %26 = vector.broadcast %c0_i32_6 : i32 to vector<8x256xi32>
    %27 = arith.cmpi eq, %18, %26 : vector<8x256xi32>
    %c15_i32 = arith.constant 15 : i32
    %28 = vector.broadcast %c15_i32 : i32 to vector<8x256xi32>
    %29 = arith.cmpi eq, %18, %28 : vector<8x256xi32>
    %c16_i32_7 = arith.constant 16 : i32
    %30 = tpu.dynamic_rotate %1 by %c16_i32_7 dim 1 : vector<8x256xf32>, i32 -> vector<8x256xf32>
    %c240_i32_8 = arith.constant 240 : i32
    %31 = tpu.dynamic_rotate %1 by %c240_i32_8 dim 1 : vector<8x256xf32>, i32 -> vector<8x256xf32>
    %32 = arith.select %20, %31, %30 : vector<8x256xi1>, vector<8x256xf32>
    %33 = arith.select %25, %30, %31 : vector<8x256xi1>, vector<8x256xf32>
    %c1_i32_9 = arith.constant 1 : i32
    %34 = tpu.dynamic_rotate %32 by %c1_i32_9 dim 1 : vector<8x256xf32>, i32 -> vector<8x256xf32>
    %c255_i32 = arith.constant 255 : i32
    %35 = tpu.dynamic_rotate %32 by %c255_i32 dim 1 : vector<8x256xf32>, i32 -> vector<8x256xf32>
    %36 = arith.select %27, %35, %34 : vector<8x256xi1>, vector<8x256xf32>
    %37 = arith.select %29, %34, %35 : vector<8x256xi1>, vector<8x256xf32>
    %c1_i32_10 = arith.constant 1 : i32
    %38 = tpu.dynamic_rotate %1 by %c1_i32_10 dim 1 : vector<8x256xf32>, i32 -> vector<8x256xf32>
    %c255_i32_11 = arith.constant 255 : i32
    %39 = tpu.dynamic_rotate %1 by %c255_i32_11 dim 1 : vector<8x256xf32>, i32 -> vector<8x256xf32>
    %40 = arith.select %27, %39, %38 : vector<8x256xi1>, vector<8x256xf32>
    %41 = arith.select %29, %38, %39 : vector<8x256xi1>, vector<8x256xf32>
    %c1_i32_12 = arith.constant 1 : i32
    %42 = tpu.dynamic_rotate %33 by %c1_i32_12 dim 1 : vector<8x256xf32>, i32 -> vector<8x256xf32>
    %c255_i32_13 = arith.constant 255 : i32
    %43 = tpu.dynamic_rotate %33 by %c255_i32_13 dim 1 : vector<8x256xf32>, i32 -> vector<8x256xf32>
    %44 = arith.select %27, %43, %42 : vector<8x256xi1>, vector<8x256xf32>
    %45 = arith.select %29, %42, %43 : vector<8x256xi1>, vector<8x256xf32>
    %c0_14 = arith.constant 0 : index
    %c0_15 = arith.constant 0 : index
    %c0_16 = arith.constant 0 : index
    %46 = vector.load %arg2[%c0_14, %c0_15, %c0_16] : memref<9x8x8xf32, #tpu.memory_space<vmem>>, vector<1x8x8xf32>
    %47 = vector.shape_cast %46 : vector<1x8x8xf32> to vector<8x8xf32>
    %cst = arith.constant dense<0.000000e+00> : vector<8x256xf32>
    %48 = tpu.matmul %47, %36, %cst {dimension_numbers = #tpu.dot_dimension_numbers<[1], [0], [0], [1], [0, 0, 1, 1], [], []>} : vector<8x8xf32>, vector<8x256xf32>, vector<8x256xf32> -> vector<8x256xf32>
    %c1 = arith.constant 1 : index
    %c0_17 = arith.constant 0 : index
    %c0_18 = arith.constant 0 : index
    %49 = vector.load %arg2[%c1, %c0_17, %c0_18] : memref<9x8x8xf32, #tpu.memory_space<vmem>>, vector<1x8x8xf32>
    %50 = vector.shape_cast %49 : vector<1x8x8xf32> to vector<8x8xf32>
    %cst_19 = arith.constant dense<0.000000e+00> : vector<8x256xf32>
    %51 = tpu.matmul %50, %32, %cst_19 {dimension_numbers = #tpu.dot_dimension_numbers<[1], [0], [0], [1], [0, 0, 1, 1], [], []>} : vector<8x8xf32>, vector<8x256xf32>, vector<8x256xf32> -> vector<8x256xf32>
    %52 = arith.addf %48, %51 : vector<8x256xf32>
    %c2 = arith.constant 2 : index
    %c0_20 = arith.constant 0 : index
    %c0_21 = arith.constant 0 : index
    %53 = vector.load %arg2[%c2, %c0_20, %c0_21] : memref<9x8x8xf32, #tpu.memory_space<vmem>>, vector<1x8x8xf32>
    %54 = vector.shape_cast %53 : vector<1x8x8xf32> to vector<8x8xf32>
    %cst_22 = arith.constant dense<0.000000e+00> : vector<8x256xf32>
    %55 = tpu.matmul %54, %37, %cst_22 {dimension_numbers = #tpu.dot_dimension_numbers<[1], [0], [0], [1], [0, 0, 1, 1], [], []>} : vector<8x8xf32>, vector<8x256xf32>, vector<8x256xf32> -> vector<8x256xf32>
    %56 = arith.addf %52, %55 : vector<8x256xf32>
    %c3 = arith.constant 3 : index
    %c0_23 = arith.constant 0 : index
    %c0_24 = arith.constant 0 : index
    %57 = vector.load %arg2[%c3, %c0_23, %c0_24] : memref<9x8x8xf32, #tpu.memory_space<vmem>>, vector<1x8x8xf32>
    %58 = vector.shape_cast %57 : vector<1x8x8xf32> to vector<8x8xf32>
    %cst_25 = arith.constant dense<0.000000e+00> : vector<8x256xf32>
    %59 = tpu.matmul %58, %40, %cst_25 {dimension_numbers = #tpu.dot_dimension_numbers<[1], [0], [0], [1], [0, 0, 1, 1], [], []>} : vector<8x8xf32>, vector<8x256xf32>, vector<8x256xf32> -> vector<8x256xf32>
    %60 = arith.addf %56, %59 : vector<8x256xf32>
    %c4 = arith.constant 4 : index
    %c0_26 = arith.constant 0 : index
    %c0_27 = arith.constant 0 : index
    %61 = vector.load %arg2[%c4, %c0_26, %c0_27] : memref<9x8x8xf32, #tpu.memory_space<vmem>>, vector<1x8x8xf32>
    %62 = vector.shape_cast %61 : vector<1x8x8xf32> to vector<8x8xf32>
    %cst_28 = arith.constant dense<0.000000e+00> : vector<8x256xf32>
    %63 = tpu.matmul %62, %1, %cst_28 {dimension_numbers = #tpu.dot_dimension_numbers<[1], [0], [0], [1], [0, 0, 1, 1], [], []>} : vector<8x8xf32>, vector<8x256xf32>, vector<8x256xf32> -> vector<8x256xf32>
    %64 = arith.addf %60, %63 : vector<8x256xf32>
    %c5 = arith.constant 5 : index
    %c0_29 = arith.constant 0 : index
    %c0_30 = arith.constant 0 : index
    %65 = vector.load %arg2[%c5, %c0_29, %c0_30] : memref<9x8x8xf32, #tpu.memory_space<vmem>>, vector<1x8x8xf32>
    %66 = vector.shape_cast %65 : vector<1x8x8xf32> to vector<8x8xf32>
    %cst_31 = arith.constant dense<0.000000e+00> : vector<8x256xf32>
    %67 = tpu.matmul %66, %41, %cst_31 {dimension_numbers = #tpu.dot_dimension_numbers<[1], [0], [0], [1], [0, 0, 1, 1], [], []>} : vector<8x8xf32>, vector<8x256xf32>, vector<8x256xf32> -> vector<8x256xf32>
    %68 = arith.addf %64, %67 : vector<8x256xf32>
    %c6 = arith.constant 6 : index
    %c0_32 = arith.constant 0 : index
    %c0_33 = arith.constant 0 : index
    %69 = vector.load %arg2[%c6, %c0_32, %c0_33] : memref<9x8x8xf32, #tpu.memory_space<vmem>>, vector<1x8x8xf32>
    %70 = vector.shape_cast %69 : vector<1x8x8xf32> to vector<8x8xf32>
    %cst_34 = arith.constant dense<0.000000e+00> : vector<8x256xf32>
    %71 = tpu.matmul %70, %44, %cst_34 {dimension_numbers = #tpu.dot_dimension_numbers<[1], [0], [0], [1], [0, 0, 1, 1], [], []>} : vector<8x8xf32>, vector<8x256xf32>, vector<8x256xf32> -> vector<8x256xf32>
    %72 = arith.addf %68, %71 : vector<8x256xf32>
    %c7 = arith.constant 7 : index
    %c0_35 = arith.constant 0 : index
    %c0_36 = arith.constant 0 : index
    %73 = vector.load %arg2[%c7, %c0_35, %c0_36] : memref<9x8x8xf32, #tpu.memory_space<vmem>>, vector<1x8x8xf32>
    %74 = vector.shape_cast %73 : vector<1x8x8xf32> to vector<8x8xf32>
    %cst_37 = arith.constant dense<0.000000e+00> : vector<8x256xf32>
    %75 = tpu.matmul %74, %33, %cst_37 {dimension_numbers = #tpu.dot_dimension_numbers<[1], [0], [0], [1], [0, 0, 1, 1], [], []>} : vector<8x8xf32>, vector<8x256xf32>, vector<8x256xf32> -> vector<8x256xf32>
    %76 = arith.addf %72, %75 : vector<8x256xf32>
    %c8 = arith.constant 8 : index
    %c0_38 = arith.constant 0 : index
    %c0_39 = arith.constant 0 : index
    %77 = vector.load %arg2[%c8, %c0_38, %c0_39] : memref<9x8x8xf32, #tpu.memory_space<vmem>>, vector<1x8x8xf32>
    %78 = vector.shape_cast %77 : vector<1x8x8xf32> to vector<8x8xf32>
    %cst_40 = arith.constant dense<0.000000e+00> : vector<8x256xf32>
    %79 = tpu.matmul %78, %45, %cst_40 {dimension_numbers = #tpu.dot_dimension_numbers<[1], [0], [0], [1], [0, 0, 1, 1], [], []>} : vector<8x8xf32>, vector<8x256xf32>, vector<8x256xf32> -> vector<8x256xf32>
    %80 = arith.addf %76, %79 : vector<8x256xf32>
    %cst_41 = arith.constant dense<0.000000e+00> : vector<8xf32>
    %81 = vector.multi_reduction <add>, %80, %cst_41 [1] : vector<8x256xf32> to vector<8xf32>
    %82 = vector.shape_cast %81 : vector<8xf32> to vector<8x1xf32>
    %cst_42 = arith.constant 3.906250e-03 : f32
    %83 = vector.broadcast %cst_42 : f32 to vector<8x1xf32>
    %84 = arith.mulf %82, %83 : vector<8x1xf32>
    %85 = vector.broadcast %84 : vector<8x1xf32> to vector<8x256xf32>
    %86 = arith.subf %80, %85 : vector<8x256xf32>
    %87 = arith.mulf %86, %86 : vector<8x256xf32>
    %cst_43 = arith.constant dense<0.000000e+00> : vector<8xf32>
    %88 = vector.multi_reduction <add>, %87, %cst_43 [1] : vector<8x256xf32> to vector<8xf32>
    %89 = vector.shape_cast %88 : vector<8xf32> to vector<8x1xf32>
    %cst_44 = arith.constant 3.906250e-03 : f32
    %90 = vector.broadcast %cst_44 : f32 to vector<8x1xf32>
    %91 = arith.mulf %89, %90 : vector<8x1xf32>
    %cst_45 = arith.constant 9.99999974E-6 : f32
    %92 = vector.broadcast %cst_45 : f32 to vector<8x1xf32>
    %93 = arith.addf %91, %92 : vector<8x1xf32>
    %94 = math.rsqrt %93 : vector<8x1xf32>
    %95 = vector.broadcast %94 : vector<8x1xf32> to vector<8x256xf32>
    %96 = arith.mulf %86, %95 : vector<8x256xf32>
    %cst_46 = arith.constant 0.000000e+00 : f32
    %97 = vector.broadcast %cst_46 : f32 to vector<8x256xf32>
    %98 = arith.maximumf %96, %97 : vector<8x256xf32>
    %c16_i32_47 = arith.constant 16 : i32
    %99 = tpu.dynamic_rotate %98 by %c16_i32_47 dim 1 : vector<8x256xf32>, i32 -> vector<8x256xf32>
    %c240_i32_48 = arith.constant 240 : i32
    %100 = tpu.dynamic_rotate %98 by %c240_i32_48 dim 1 : vector<8x256xf32>, i32 -> vector<8x256xf32>
    %101 = arith.select %20, %100, %99 : vector<8x256xi1>, vector<8x256xf32>
    %102 = arith.select %25, %99, %100 : vector<8x256xi1>, vector<8x256xf32>
    %c1_i32_49 = arith.constant 1 : i32
    %103 = tpu.dynamic_rotate %101 by %c1_i32_49 dim 1 : vector<8x256xf32>, i32 -> vector<8x256xf32>
    %c255_i32_50 = arith.constant 255 : i32
    %104 = tpu.dynamic_rotate %101 by %c255_i32_50 dim 1 : vector<8x256xf32>, i32 -> vector<8x256xf32>
    %105 = arith.select %27, %104, %103 : vector<8x256xi1>, vector<8x256xf32>
    %106 = arith.select %29, %103, %104 : vector<8x256xi1>, vector<8x256xf32>
    %c1_i32_51 = arith.constant 1 : i32
    %107 = tpu.dynamic_rotate %98 by %c1_i32_51 dim 1 : vector<8x256xf32>, i32 -> vector<8x256xf32>
    %c255_i32_52 = arith.constant 255 : i32
    %108 = tpu.dynamic_rotate %98 by %c255_i32_52 dim 1 : vector<8x256xf32>, i32 -> vector<8x256xf32>
    %109 = arith.select %27, %108, %107 : vector<8x256xi1>, vector<8x256xf32>
    %110 = arith.select %29, %107, %108 : vector<8x256xi1>, vector<8x256xf32>
    %c1_i32_53 = arith.constant 1 : i32
    %111 = tpu.dynamic_rotate %102 by %c1_i32_53 dim 1 : vector<8x256xf32>, i32 -> vector<8x256xf32>
    %c255_i32_54 = arith.constant 255 : i32
    %112 = tpu.dynamic_rotate %102 by %c255_i32_54 dim 1 : vector<8x256xf32>, i32 -> vector<8x256xf32>
    %113 = arith.select %27, %112, %111 : vector<8x256xi1>, vector<8x256xf32>
    %114 = arith.select %29, %111, %112 : vector<8x256xi1>, vector<8x256xf32>
    %c0_55 = arith.constant 0 : index
    %c0_56 = arith.constant 0 : index
    %c0_57 = arith.constant 0 : index
    %115 = vector.load %arg3[%c0_55, %c0_56, %c0_57] : memref<9x8x8xf32, #tpu.memory_space<vmem>>, vector<1x8x8xf32>
    %116 = vector.shape_cast %115 : vector<1x8x8xf32> to vector<8x8xf32>
    %cst_58 = arith.constant dense<0.000000e+00> : vector<8x256xf32>
    %117 = tpu.matmul %116, %105, %cst_58 {dimension_numbers = #tpu.dot_dimension_numbers<[1], [0], [0], [1], [0, 0, 1, 1], [], []>} : vector<8x8xf32>, vector<8x256xf32>, vector<8x256xf32> -> vector<8x256xf32>
    %c1_59 = arith.constant 1 : index
    %c0_60 = arith.constant 0 : index
    %c0_61 = arith.constant 0 : index
    %118 = vector.load %arg3[%c1_59, %c0_60, %c0_61] : memref<9x8x8xf32, #tpu.memory_space<vmem>>, vector<1x8x8xf32>
    %119 = vector.shape_cast %118 : vector<1x8x8xf32> to vector<8x8xf32>
    %cst_62 = arith.constant dense<0.000000e+00> : vector<8x256xf32>
    %120 = tpu.matmul %119, %101, %cst_62 {dimension_numbers = #tpu.dot_dimension_numbers<[1], [0], [0], [1], [0, 0, 1, 1], [], []>} : vector<8x8xf32>, vector<8x256xf32>, vector<8x256xf32> -> vector<8x256xf32>
    %121 = arith.addf %117, %120 : vector<8x256xf32>
    %c2_63 = arith.constant 2 : index
    %c0_64 = arith.constant 0 : index
    %c0_65 = arith.constant 0 : index
    %122 = vector.load %arg3[%c2_63, %c0_64, %c0_65] : memref<9x8x8xf32, #tpu.memory_space<vmem>>, vector<1x8x8xf32>
    %123 = vector.shape_cast %122 : vector<1x8x8xf32> to vector<8x8xf32>
    %cst_66 = arith.constant dense<0.000000e+00> : vector<8x256xf32>
    %124 = tpu.matmul %123, %106, %cst_66 {dimension_numbers = #tpu.dot_dimension_numbers<[1], [0], [0], [1], [0, 0, 1, 1], [], []>} : vector<8x8xf32>, vector<8x256xf32>, vector<8x256xf32> -> vector<8x256xf32>
    %125 = arith.addf %121, %124 : vector<8x256xf32>
    %c3_67 = arith.constant 3 : index
    %c0_68 = arith.constant 0 : index
    %c0_69 = arith.constant 0 : index
    %126 = vector.load %arg3[%c3_67, %c0_68, %c0_69] : memref<9x8x8xf32, #tpu.memory_space<vmem>>, vector<1x8x8xf32>
    %127 = vector.shape_cast %126 : vector<1x8x8xf32> to vector<8x8xf32>
    %cst_70 = arith.constant dense<0.000000e+00> : vector<8x256xf32>
    %128 = tpu.matmul %127, %109, %cst_70 {dimension_numbers = #tpu.dot_dimension_numbers<[1], [0], [0], [1], [0, 0, 1, 1], [], []>} : vector<8x8xf32>, vector<8x256xf32>, vector<8x256xf32> -> vector<8x256xf32>
    %129 = arith.addf %125, %128 : vector<8x256xf32>
    %c4_71 = arith.constant 4 : index
    %c0_72 = arith.constant 0 : index
    %c0_73 = arith.constant 0 : index
    %130 = vector.load %arg3[%c4_71, %c0_72, %c0_73] : memref<9x8x8xf32, #tpu.memory_space<vmem>>, vector<1x8x8xf32>
    %131 = vector.shape_cast %130 : vector<1x8x8xf32> to vector<8x8xf32>
    %cst_74 = arith.constant dense<0.000000e+00> : vector<8x256xf32>
    %132 = tpu.matmul %131, %98, %cst_74 {dimension_numbers = #tpu.dot_dimension_numbers<[1], [0], [0], [1], [0, 0, 1, 1], [], []>} : vector<8x8xf32>, vector<8x256xf32>, vector<8x256xf32> -> vector<8x256xf32>
    %133 = arith.addf %129, %132 : vector<8x256xf32>
    %c5_75 = arith.constant 5 : index
    %c0_76 = arith.constant 0 : index
    %c0_77 = arith.constant 0 : index
    %134 = vector.load %arg3[%c5_75, %c0_76, %c0_77] : memref<9x8x8xf32, #tpu.memory_space<vmem>>, vector<1x8x8xf32>
    %135 = vector.shape_cast %134 : vector<1x8x8xf32> to vector<8x8xf32>
    %cst_78 = arith.constant dense<0.000000e+00> : vector<8x256xf32>
    %136 = tpu.matmul %135, %110, %cst_78 {dimension_numbers = #tpu.dot_dimension_numbers<[1], [0], [0], [1], [0, 0, 1, 1], [], []>} : vector<8x8xf32>, vector<8x256xf32>, vector<8x256xf32> -> vector<8x256xf32>
    %137 = arith.addf %133, %136 : vector<8x256xf32>
    %c6_79 = arith.constant 6 : index
    %c0_80 = arith.constant 0 : index
    %c0_81 = arith.constant 0 : index
    %138 = vector.load %arg3[%c6_79, %c0_80, %c0_81] : memref<9x8x8xf32, #tpu.memory_space<vmem>>, vector<1x8x8xf32>
    %139 = vector.shape_cast %138 : vector<1x8x8xf32> to vector<8x8xf32>
    %cst_82 = arith.constant dense<0.000000e+00> : vector<8x256xf32>
    %140 = tpu.matmul %139, %113, %cst_82 {dimension_numbers = #tpu.dot_dimension_numbers<[1], [0], [0], [1], [0, 0, 1, 1], [], []>} : vector<8x8xf32>, vector<8x256xf32>, vector<8x256xf32> -> vector<8x256xf32>
    %141 = arith.addf %137, %140 : vector<8x256xf32>
    %c7_83 = arith.constant 7 : index
    %c0_84 = arith.constant 0 : index
    %c0_85 = arith.constant 0 : index
    %142 = vector.load %arg3[%c7_83, %c0_84, %c0_85] : memref<9x8x8xf32, #tpu.memory_space<vmem>>, vector<1x8x8xf32>
    %143 = vector.shape_cast %142 : vector<1x8x8xf32> to vector<8x8xf32>
    %cst_86 = arith.constant dense<0.000000e+00> : vector<8x256xf32>
    %144 = tpu.matmul %143, %102, %cst_86 {dimension_numbers = #tpu.dot_dimension_numbers<[1], [0], [0], [1], [0, 0, 1, 1], [], []>} : vector<8x8xf32>, vector<8x256xf32>, vector<8x256xf32> -> vector<8x256xf32>
    %145 = arith.addf %141, %144 : vector<8x256xf32>
    %c8_87 = arith.constant 8 : index
    %c0_88 = arith.constant 0 : index
    %c0_89 = arith.constant 0 : index
    %146 = vector.load %arg3[%c8_87, %c0_88, %c0_89] : memref<9x8x8xf32, #tpu.memory_space<vmem>>, vector<1x8x8xf32>
    %147 = vector.shape_cast %146 : vector<1x8x8xf32> to vector<8x8xf32>
    %cst_90 = arith.constant dense<0.000000e+00> : vector<8x256xf32>
    %148 = tpu.matmul %147, %114, %cst_90 {dimension_numbers = #tpu.dot_dimension_numbers<[1], [0], [0], [1], [0, 0, 1, 1], [], []>} : vector<8x8xf32>, vector<8x256xf32>, vector<8x256xf32> -> vector<8x256xf32>
    %149 = arith.addf %145, %148 : vector<8x256xf32>
    %cst_91 = arith.constant dense<0.000000e+00> : vector<8xf32>
    %150 = vector.multi_reduction <add>, %149, %cst_91 [1] : vector<8x256xf32> to vector<8xf32>
    %151 = vector.shape_cast %150 : vector<8xf32> to vector<8x1xf32>
    %cst_92 = arith.constant 3.906250e-03 : f32
    %152 = vector.broadcast %cst_92 : f32 to vector<8x1xf32>
    %153 = arith.mulf %151, %152 : vector<8x1xf32>
    %154 = vector.broadcast %153 : vector<8x1xf32> to vector<8x256xf32>
    %155 = arith.subf %149, %154 : vector<8x256xf32>
    %156 = arith.mulf %155, %155 : vector<8x256xf32>
    %cst_93 = arith.constant dense<0.000000e+00> : vector<8xf32>
    %157 = vector.multi_reduction <add>, %156, %cst_93 [1] : vector<8x256xf32> to vector<8xf32>
    %158 = vector.shape_cast %157 : vector<8xf32> to vector<8x1xf32>
    %cst_94 = arith.constant 3.906250e-03 : f32
    %159 = vector.broadcast %cst_94 : f32 to vector<8x1xf32>
    %160 = arith.mulf %158, %159 : vector<8x1xf32>
    %cst_95 = arith.constant 9.99999974E-6 : f32
    %161 = vector.broadcast %cst_95 : f32 to vector<8x1xf32>
    %162 = arith.addf %160, %161 : vector<8x1xf32>
    %163 = math.rsqrt %162 : vector<8x1xf32>
    %164 = vector.broadcast %163 : vector<8x1xf32> to vector<8x256xf32>
    %165 = arith.mulf %155, %164 : vector<8x256xf32>
    %166 = arith.addf %1, %165 : vector<8x256xf32>
    %167 = vector.shape_cast %166 : vector<8x256xf32> to vector<1x8x256xf32>
    %c0_96 = arith.constant 0 : index
    %c0_97 = arith.constant 0 : index
    %c0_98 = arith.constant 0 : index
    %168 = vector.load %arg4[%c0_96, %c0_97, %c0_98] : memref<1x8x256xf32, #tpu.memory_space<vmem>>, vector<1x8x256xf32>
    tpu.vector_store %arg4[%c0_96, %c0_97, %c0_98], %167 {strides = array<i32>} : memref<1x8x256xf32, #tpu.memory_space<vmem>>, vector<1x8x256xf32>,
    return
  }
  func.func @transform_0(%arg0: i32) -> (i32, i32, i32) {
    %c0_i32 = arith.constant 0 : i32
    %c0_i32_0 = arith.constant 0 : i32
    %c0_i32_1 = arith.constant 0 : i32
    return %arg0, %c0_i32, %c0_i32_0 : i32, i32, i32
  }
  func.func @transform_1(%arg0: i32) -> (i32, i32, i32) {
    %c0_i32 = arith.constant 0 : i32
    %c0_i32_0 = arith.constant 0 : i32
    %c0_i32_1 = arith.constant 0 : i32
    %c0_i32_2 = arith.constant 0 : i32
    return %c0_i32, %c0_i32_0, %c0_i32_1 : i32, i32, i32
  }
  func.func @transform_2(%arg0: i32) -> (i32, i32, i32) {
    %c0_i32 = arith.constant 0 : i32
    %c0_i32_0 = arith.constant 0 : i32
    %c0_i32_1 = arith.constant 0 : i32
    %c0_i32_2 = arith.constant 0 : i32
    return %c0_i32, %c0_i32_0, %c0_i32_1 : i32, i32, i32
  }
  func.func @transform_3(%arg0: i32) -> (i32, i32, i32) {
    %c0_i32 = arith.constant 0 : i32
    %c0_i32_0 = arith.constant 0 : i32
    %c0_i32_1 = arith.constant 0 : i32
    return %arg0, %c0_i32, %c0_i32_0 : i32, i32, i32
  }
}

</mosaic_0001>

<llo_original>
// kernel: residual_block_forward.1
$region0: #{residual_block_forward.1}
  #allocation0 [shape = 'u32[]', space=smem, size = 0x4, offset = 0x4, fixed_abs, tag = 'smem constant byte address 0x4 - core index']
  #allocation1 [shape = 'u32[144,128]{1,0:T(1,128)}', space=vmem, size = 0x12000, scoped, tag = 'internal scratch']
  %s0 = inlined_call_operand.vmem [shape: f32[2,8,256], index: 0, kind: input, shape index: {}, may-alias: {0,3}]
  %s1 = inlined_call_operand.vmem [shape: f32[9,8,8], index: 1, kind: input, shape index: {}]
  %s2 = inlined_call_operand.vmem [shape: f32[9,8,8], index: 2, kind: input, shape index: {}]
  %s3 = inlined_call_operand.vmem [shape: f32[2,8,256], index: 3, kind: output, shape index: {}, may-alias: {0,3}]
  %s4 = sld [smem:[#allocation0]]
  $region45: #{residual_block_forward.1} parent=0
    _
  %s6 = ssub.s32 1, %s4
  %s7 = scalar_select 0, %s6, %s4
  loop: start=0, step=1, limit=4
  $region2: #{residual_block_forward.1} parent=0 // loop_pre_header
    _
  $region3: #{residual_block_forward.1} parent=0 // loop_header
    %s9 = sphi 0, %s13
    %p10 = scmp.ge.s32.totalorder %s9, 4
    %s19 = sphi 0, %s21
    %s22 = sphi 0, %s19
    %s23 = sphi 0, %s22
    %s39 = sphi 0, %s23
    %s43 = sphi 0, %s43
    %s45 = sphi 0, %s43
    %s46 = sphi 0, %s45
    %s60 = sphi 0, %s46
    %s64 = sphi 0, %s64
    %s66 = sphi 0, %s64
    %s67 = sphi 0, %s66
    %s81 = sphi 0, %s67
    %s87 = sphi 0, %s89
    %s90 = sphi 0, %s87
    %s91 = sphi 0, %s90
    %s107 = sphi 0, %s91
  $region4: #{residual_block_forward.1} parent=0 // loop_header_branch
    %12 = sbr.rel (%p10) target = $region8
  $region5: #{residual_block_forward.1} parent=0 // loop_body
    %s14 = ssub.s32 %s9, 1
    %s15 = ssub.s32 %s9, 2
    %s16 = sadd.s32 %s9, 1
    %s17 = ssub.s32 %s9, %s16
    %p18 = scmp.eq.s32.totalorder %s17, 0
    %s20 = sadd.s32 %s19, 1
    %s21 = scalar_select %p18, %s19, %s20
    %p24 = pneg %p18
    %p25 = scmp.eq.s32.totalorder %s9, 1
    %p26 = por %p24, %p25
    %p27 = scmp.ne.s32.totalorder %s19, %s22
    %p28 = scmp.eq.s32.totalorder %s9, 0
    %p29 = por %p27, %p28
    %p30 = scmp.ne.s32.totalorder %s19, %s22
    %p31 = scmp.eq.s32.totalorder %s14, 1
    %p32 = por %p30, %p31
    %p33 = scmp.ne.s32.totalorder %s22, %s23
    %p34 = scmp.eq.s32.totalorder %s14, 0
    %p35 = por %p33, %p34
    %p36 = scmp.ne.s32.totalorder %s22, %s23
    %p37 = scmp.eq.s32.totalorder %s15, 1
    %p38 = por %p36, %p37
    %p40 = scmp.ne.s32.totalorder %s23, %s39
    %p41 = scmp.eq.s32.totalorder %s15, 0
    %p42 = por %p40, %p41
    %s44 = sadd.s32 %s43, 1
    %p47 = scmp.eq.s32.totalorder %s9, 1
    %p48 = scmp.ne.s32.totalorder %s43, %s45
    %p49 = scmp.eq.s32.totalorder %s9, 0
    %p50 = por %p48, %p49
    %p51 = scmp.ne.s32.totalorder %s43, %s45
    %p52 = scmp.eq.s32.totalorder %s14, 1
    %p53 = por %p51, %p52
    %p54 = scmp.ne.s32.totalorder %s45, %s46
    %p55 = scmp.eq.s32.totalorder %s14, 0
    %p56 = por %p54, %p55
    %p57 = scmp.ne.s32.totalorder %s45, %s46
    %p58 = scmp.eq.s32.totalorder %s15, 1
    %p59 = por %p57, %p58
    %p61 = scmp.ne.s32.totalorder %s46, %s60
    %p62 = scmp.eq.s32.totalorder %s15, 0
    %p63 = por %p61, %p62
    %s65 = sadd.s32 %s64, 1
    %p68 = scmp.eq.s32.totalorder %s9, 1
    %p69 = scmp.ne.s32.totalorder %s64, %s66
    %p70 = scmp.eq.s32.totalorder %s9, 0
    %p71 = por %p69, %p70
    %p72 = scmp.ne.s32.totalorder %s64, %s66
    %p73 = scmp.eq.s32.totalorder %s14, 1
    %p74 = por %p72, %p73
    %p75 = scmp.ne.s32.totalorder %s66, %s67
    %p76 = scmp.eq.s32.totalorder %s14, 0
    %p77 = por %p75, %p76
    %p78 = scmp.ne.s32.totalorder %s66, %s67
    %p79 = scmp.eq.s32.totalorder %s15, 1
    %p80 = por %p78, %p79
    %p82 = scmp.ne.s32.totalorder %s67, %s81
    %p83 = scmp.eq.s32.totalorder %s15, 0
    %p84 = por %p82, %p83
    %s85 = ssub.s32 %s9, %s16
    %p86 = scmp.eq.s32.totalorder %s85, 0
    %s88 = sadd.s32 %s87, 1
    %s89 = scalar_select %p86, %s87, %s88
    %p92 = pneg %p86
    %p93 = scmp.eq.s32.totalorder %s9, 1
    %p94 = por %p92, %p93
    %p95 = scmp.ne.s32.totalorder %s87, %s90
    %p96 = scmp.eq.s32.totalorder %s9, 0
    %p97 = por %p95, %p96
    %p98 = scmp.ne.s32.totalorder %s87, %s90
    %p99 = scmp.eq.s32.totalorder %s14, 1
    %p100 = por %p98, %p99
    %p101 = scmp.ne.s32.totalorder %s90, %s91
    %p102 = scmp.eq.s32.totalorder %s14, 0
    %p103 = por %p101, %p102
    %p104 = scmp.ne.s32.totalorder %s90, %s91
    %p105 = scmp.eq.s32.totalorder %s15, 1
    %p106 = por %p104, %p105
    %p108 = scmp.ne.s32.totalorder %s91, %s107
    %p109 = scmp.eq.s32.totalorder %s15, 0
    %p110 = por %p108, %p109
    %p111 = scmp.le.s32.totalorder 1, %s9
    %p112 = scmp.lt.s32.totalorder %s9, 3
    %p113 = pnand %p111, %p112
    %p114 = pneg %p113
    // Predicated region
    $region9: #{residual_block_forward.1} parent=5 // pred_check
      _
    $region10: #{residual_block_forward.1} parent=5 // pred_check_branch
      %116 = sbr.rel (%p113) target = $region12
    $region11: #{residual_block_forward.1} parent=5 // pred_region
      %s117 = ssub.s32 %s9, 1
      // Predicated region
      $region13: #{residual_block_forward.1} parent=11 // pred_check
        %p118 = pneg %p56
      $region14: #{residual_block_forward.1} parent=11 // pred_check_branch
        %120 = sbr.rel (%p118) target = $region16
      $region15: #{residual_block_forward.1} parent=11 // pred_region
        _
      $region16: #{residual_block_forward.1} parent=11 // pred_fallthru
        _
      // Predicated region
      $region17: #{residual_block_forward.1} parent=11 // pred_check
        %p121 = pneg %p77
      $region18: #{residual_block_forward.1} parent=11 // pred_check_branch
        %123 = sbr.rel (%p121) target = $region20
      $region19: #{residual_block_forward.1} parent=11 // pred_region
        _
      $region20: #{residual_block_forward.1} parent=11 // pred_fallthru
        _
    $region12: #{residual_block_forward.1} parent=5 // pred_fallthru
      _
    %p124 = scmp.lt.s32.totalorder %s9, 2
    // Predicated region
    $region21: #{residual_block_forward.1} parent=5 // pred_check
      %p125 = pneg %p124
    $region22: #{residual_block_forward.1} parent=5 // pred_check_branch
      %127 = sbr.rel (%p125) target = $region24
    $region23: #{residual_block_forward.1} parent=5 // pred_region
      // Predicated region
      $region25: #{residual_block_forward.1} parent=23 // pred_check
        %p128 = pneg %p29
      $region26: #{residual_block_forward.1} parent=23 // pred_check_branch
        %130 = sbr.rel (%p128) target = $region28
      $region27: #{residual_block_forward.1} parent=23 // pred_region
        %p131 = scmp.lt.s32.totalorder %s9, 1
        %s132 = scalar_select %p131, %s9, 1
        %s133 = smul.addr %s132, 2
        %s134 = smul.addr %s133, 8
        %s135 = scalar_lea.vmem %s0, %s134
      $region28: #{residual_block_forward.1} parent=23 // pred_fallthru
        _
    $region24: #{residual_block_forward.1} parent=5 // pred_fallthru
      _
    %p136 = scmp.le.s32.totalorder 1, %s9
    %p137 = scmp.lt.s32.totalorder %s9, 3
    %p138 = pnand %p136, %p137
    %p139 = pneg %p138
    // Predicated region
    $region29: #{residual_block_forward.1} parent=5 // pred_check
      _
    $region30: #{residual_block_forward.1} parent=5 // pred_check_branch
      %141 = sbr.rel (%p138) target = $region32
    $region31: #{residual_block_forward.1} parent=5 // pred_region
      %s142 = ssub.s32 %s9, 1
      %p143 = scmp.lt.s32.totalorder %s14, 1
      %s144 = scalar_select %p143, %s14, 1
      %s145 = smul.addr %s144, 2
      %s146 = smul.addr %s145, 8
      %s147 = scalar_lea.vmem %s0, %s146
      %p148 = pneg %p35
      %p149 = pneg %p32
      %p150 = pneg %p56
      %p151 = pneg %p53
      %p152 = pneg %p77
      %p153 = pneg %p74
      %p154 = pneg %p103
      %p155 = pneg %p100
      %p156 = scmp.lt.s32.totalorder %s14, 1
      %s157 = scalar_select %p156, %s14, 1
      %s158 = smul.addr %s157, 2
      %s159 = smul.addr %s158, 8
      %s160 = scalar_lea.vmem %s3, %s159
      %p161 = scmp.lt.s32.totalorder %s14, 1
      %s162 = scalar_select %p161, %s14, 1
      %s163 = smul.addr %s162, 2
      %s164 = smul.addr %s163, 8
      %s165 = scalar_lea.vmem %s0, %s164
      %p166 = scmp.lt.s32.totalorder %s14, 1
      %s167 = scalar_select %p166, %s14, 1
      %s168 = smul.addr %s167, 2
      %s169 = smul.addr %s168, 8
      %s170 = scalar_lea.vmem %s3, %s169
      %v171 = vld [vmem:[%s165] sm:$0xff]
      %v172 = vld [vmem:[%s165 + $0x8] sm:$0xff]
      %v173 = vlaneseq
      %v174 = vand.u32 %v173, 127
      %v175 = vadd.s32 %v174, 128
      %vm176 = vcmp.lt.s32.totalorder %v174, 0
      %v177 = vsub.s32 0, %v174
      %v178 = vsel %vm176, %v177, %v174
      %v179 = vshrl.u32 %v178, 4
      %v180 = vand.u32 %v178, 15
      %v181 = vsub.s32 0, %v180
      %v182 = vsel %vm176, %v181, %v180
      %vm183 = vcmp.lt.s32.totalorder %v175, 0
      %v184 = vsub.s32 0, %v175
      %v185 = vsel %vm183, %v184, %v175
      %v186 = vshrl.u32 %v185, 4
      %v187 = vand.u32 %v185, 15
      %v188 = vsub.s32 0, %v187
      %v189 = vsel %vm183, %v188, %v187
      %vm190 = vcmp.ne.s32.totalorder %v182, 0
      %vm191 = vcmp.ne.s32.totalorder %v189, 0
      %vm192 = vcmp.lt.s32.totalorder %v182, 0
      %vm193 = vcmp.lt.s32.totalorder %v189, 0
      %vm194 = vmand %vm192, %vm190
      %vm195 = vmand %vm193, %vm191
      %v196 = vadd.s32 %v182, 16
      %v197 = vadd.s32 %v189, 16
      %v198 = vsel %vm194, %v196, %v182
      %v199 = vsel %vm195, %v197, %v189
      %vm200 = vcmp.lt.s32.totalorder %v174, 16
      %vm201 = vcmp.lt.s32.totalorder %v175, 16
      %vm202 = vcmp.ge.s32.totalorder %v174, 240
      %vm203 = vcmp.ge.s32.totalorder %v175, 240
      %vm204 = vcmp.lt.s32.totalorder %v174, 256
      %vm205 = vcmp.lt.s32.totalorder %v175, 256
      %vm206 = vmand %vm202, %vm204
      %vm207 = vmand %vm203, %vm205
      %vm208 = vcmp.eq.s32.totalorder %v198, 0
      %vm209 = vcmp.eq.s32.totalorder %v199, 0
      %vm210 = vcmp.eq.s32.totalorder %v198, 15
      %vm211 = vcmp.eq.s32.totalorder %v199, 15
      %212 = vrot.lane.b32.xlu0 %v171, 16
      %v213 = vpop.permute.xlu0 %212
      %214 = vrot.lane.b32.xlu0 %v172, 16
      %v215 = vpop.permute.xlu0 %214
      %v216 = vsel %vm200, %v213, %v215
      %v217 = vsel %vm200, %v215, %v213
      %218 = vrot.lane.b32.xlu0 %v171, 112
      %v219 = vpop.permute.xlu0 %218
      %220 = vrot.lane.b32.xlu0 %v172, 112
      %v221 = vpop.permute.xlu0 %220
      %vm222 = vcmp.lt.s32.totalorder %v174, 112
      %v223 = vsel %vm222, %v219, %v221
      %v224 = vsel %vm222, %v221, %v219
      %v225 = vsel %vm200, %v223, %v217
      %v226 = vsel %vm201, %v224, %v216
      %v227 = vsel %vm206, %v217, %v223
      %v228 = vsel %vm207, %v216, %v224
      %229 = vrot.lane.b32.xlu0 %v225, 1
      %v230 = vpop.permute.xlu0 %229
      %231 = vrot.lane.b32.xlu0 %v226, 1
      %v232 = vpop.permute.xlu0 %231
      %vm233 = vcmp.lt.s32.totalorder %v174, 1
      %v234 = vsel %vm233, %v230, %v232
      %v235 = vsel %vm233, %v232, %v230
      %236 = vrot.lane.b32.xlu0 %v225, 127
      %v237 = vpop.permute.xlu0 %236
      %238 = vrot.lane.b32.xlu0 %v226, 127
      %v239 = vpop.permute.xlu0 %238
      %vm240 = vcmp.lt.s32.totalorder %v174, 127
      %v241 = vsel %vm240, %v237, %v239
      %v242 = vsel %vm240, %v239, %v237
      %v243 = vsel %vm208, %v241, %v235
      %v244 = vsel %vm209, %v242, %v234
      %v245 = vsel %vm210, %v235, %v241
      %v246 = vsel %vm211, %v234, %v242
      %247 = vrot.lane.b32.xlu0 %v171, 1
      %v248 = vpop.permute.xlu0 %247
      %249 = vrot.lane.b32.xlu0 %v172, 1
      %v250 = vpop.permute.xlu0 %249
      %v251 = vsel %vm233, %v248, %v250
      %v252 = vsel %vm233, %v250, %v248
      %253 = vrot.lane.b32.xlu0 %v171, 127
      %v254 = vpop.permute.xlu0 %253
      %255 = vrot.lane.b32.xlu0 %v172, 127
      %v256 = vpop.permute.xlu0 %255
      %v257 = vsel %vm240, %v254, %v256
      %v258 = vsel %vm240, %v256, %v254
      %v259 = vsel %vm208, %v257, %v252
      %v260 = vsel %vm209, %v258, %v251
      %v261 = vsel %vm210, %v252, %v257
      %v262 = vsel %vm211, %v251, %v258
      %263 = vrot.lane.b32.xlu0 %v227, 1
      %v264 = vpop.permute.xlu0 %263
      %265 = vrot.lane.b32.xlu0 %v228, 1
      %v266 = vpop.permute.xlu0 %265
      %v267 = vsel %vm233, %v264, %v266
      %v268 = vsel %vm233, %v266, %v264
      %269 = vrot.lane.b32.xlu0 %v227, 127
      %v270 = vpop.permute.xlu0 %269
      %271 = vrot.lane.b32.xlu0 %v228, 127
      %v272 = vpop.permute.xlu0 %271
      %v273 = vsel %vm240, %v270, %v272
      %v274 = vsel %vm240, %v272, %v270
      %v275 = vsel %vm208, %v273, %v268
      %v276 = vsel %vm209, %v274, %v267
      %v277 = vsel %vm210, %v268, %v273
      %v278 = vsel %vm211, %v267, %v274
      %v279 = vld [vmem:[%s1] sm:$0xff]
      %s280 = scalar_lea.vmem %s1, 8
      %v281 = vld [vmem:[%s280] sm:$0xff]
      %vm282 = vcmask 64512
      %v284 = vsel %vm282, %v281, 0
      %286 = vmatprep.subr.mxu0 %v226
      %287 = vmatpush1.msra.mxu0 %v225
      %288 = vmatprep.subr.mxu0 0.0
      %289 = vmatpush1.msra.mxu0 0.0
      %290 = vmatprep.subr.mxu0 0.0
      %291 = vmatpush1.msra.mxu0 0.0
      %292 = vmatprep.subr.mxu0 0.0
      %293 = vmatpush1.msra.mxu0 0.0
      %294 = vmatprep.subr.mxu0 0.0
      %295 = vmatpush1.msra.mxu0 0.0
      %296 = vmatprep.subr.mxu0 0.0
      %297 = vmatpush1.msra.mxu0 0.0
      %298 = vmatprep.subr.mxu0 0.0
      %299 = vmatpush1.msra.mxu0 0.0
      %300 = vmatprep.subr.mxu0 0.0
      %301 = vmatpush1.msra.mxu0 0.0
      %302 = vmatprep.subr.mxu0 0.0
      %303 = vmatpush1.msra.mxu0 0.0
      %304 = vmatprep.subr.mxu0 0.0
      %305 = vmatpush1.msra.mxu0 0.0
      %306 = vmatprep.subr.mxu0 0.0
      %307 = vmatpush1.msra.mxu0 0.0
      %308 = vmatprep.subr.mxu0 0.0
      %309 = vmatpush1.msra.mxu0 0.0
      %310 = vmatprep.subr.mxu0 0.0
      %311 = vmatpush1.msra.mxu0 0.0
      %312 = vmatprep.subr.mxu0 0.0
      %313 = vmatpush1.msra.mxu0 0.0
      %314 = vmatprep.subr.mxu0 0.0
      %315 = vmatpush1.msra.mxu0 0.0
      %316 = vmatprep.subr.mxu0 0.0
      %317 = vmatpush1.msra.mxu0 0.0
      %318 = vmatprep.subr.mxu0 0.0
      %319 = vmatpush1.msra.mxu0 0.0
      %320 = vmatprep.subr.mxu0 0.0
      %321 = vmatpush1.msra.mxu0 0.0
      %322 = vmatprep.subr.mxu0 0.0
      %323 = vmatpush1.msra.mxu0 0.0
      %324 = vmatprep.subr.mxu0 0.0
      %325 = vmatpush1.msra.mxu0 0.0
      %326 = vmatprep.subr.mxu0 0.0
      %327 = vmatpush1.msra.mxu0 0.0
      %328 = vmatprep.subr.mxu0 0.0
      %329 = vmatpush1.msra.mxu0 0.0
      %330 = vmatprep.subr.mxu0 0.0
      %331 = vmatpush1.msra.mxu0 0.0
      %332 = vmatprep.subr.mxu0 0.0
      %333 = vmatpush1.msra.mxu0 0.0
      %334 = vmatprep.subr.mxu0 0.0
      %335 = vmatpush1.msra.mxu0 0.0
      %336 = vmatprep.subr.mxu0 0.0
      %337 = vmatpush1.msra.mxu0 0.0
      %338 = vmatprep.subr.mxu0 0.0
      %339 = vmatpush1.msra.mxu0 0.0
      %340 = vmatprep.subr.mxu0 0.0
      %341 = vmatpush1.msra.mxu0 0.0
      %342 = vmatprep.subr.mxu0 0.0
      %343 = vmatpush1.msra.mxu0 0.0
      %344 = vmatprep.subr.mxu0 0.0
      %345 = vmatpush1.msra.mxu0 0.0
      %346 = vmatprep.subr.mxu0 0.0
      %347 = vmatpush1.msra.mxu0 0.0
      %348 = vmatprep.subr.mxu0 0.0
      %349 = vmatpush1.msra.mxu0 0.0
      %350 = vmatprep.mubr.f32.mxu0 0.0
      %351 = vmatmul.mubr.f32.gmra.mrb[0].mxu0 %v284
      %v352 = vpop.f32.mrb[0].mxu0
      %v353 = vadd.f32 0.0, %v352
      %v354 = vpop.f32.mrb[0].mxu0
      %v355 = vadd.f32 0.0, %v354
      %356 = vdwg.mxu0
      %v358 = vsel %vm282, %v279, 0
      %360 = vmatprep.subr.mxu0 %v244
      %361 = vmatpush1.msra.mxu0 %v243
      %362 = vmatprep.subr.mxu0 0.0
      %363 = vmatpush1.msra.mxu0 0.0
      %364 = vmatprep.subr.mxu0 0.0
      %365 = vmatpush1.msra.mxu0 0.0
      %366 = vmatprep.subr.mxu0 0.0
      %367 = vmatpush1.msra.mxu0 0.0
      %368 = vmatprep.subr.mxu0 0.0
      %369 = vmatpush1.msra.mxu0 0.0
      %370 = vmatprep.subr.mxu0 0.0
      %371 = vmatpush1.msra.mxu0 0.0
      %372 = vmatprep.subr.mxu0 0.0
      %373 = vmatpush1.msra.mxu0 0.0
      %374 = vmatprep.subr.mxu0 0.0
      %375 = vmatpush1.msra.mxu0 0.0
      %376 = vmatprep.subr.mxu0 0.0
      %377 = vmatpush1.msra.mxu0 0.0
      %378 = vmatprep.subr.mxu0 0.0
      %379 = vmatpush1.msra.mxu0 0.0
      %380 = vmatprep.subr.mxu0 0.0
      %381 = vmatpush1.msra.mxu0 0.0
      %382 = vmatprep.subr.mxu0 0.0
      %383 = vmatpush1.msra.mxu0 0.0
      %384 = vmatprep.subr.mxu0 0.0
      %385 = vmatpush1.msra.mxu0 0.0
      %386 = vmatprep.subr.mxu0 0.0
      %387 = vmatpush1.msra.mxu0 0.0
      %388 = vmatprep.subr.mxu0 0.0
      %389 = vmatpush1.msra.mxu0 0.0
      %390 = vmatprep.subr.mxu0 0.0
      %391 = vmatpush1.msra.mxu0 0.0
      %392 = vmatprep.subr.mxu0 0.0
      %393 = vmatpush1.msra.mxu0 0.0
      %394 = vmatprep.subr.mxu0 0.0
      %395 = vmatpush1.msra.mxu0 0.0
      %396 = vmatprep.subr.mxu0 0.0
      %397 = vmatpush1.msra.mxu0 0.0
      %398 = vmatprep.subr.mxu0 0.0
      %399 = vmatpush1.msra.mxu0 0.0
      %400 = vmatprep.subr.mxu0 0.0
      %401 = vmatpush1.msra.mxu0 0.0
      %402 = vmatprep.subr.mxu0 0.0
      %403 = vmatpush1.msra.mxu0 0.0
      %404 = vmatprep.subr.mxu0 0.0
      %405 = vmatpush1.msra.mxu0 0.0
      %406 = vmatprep.subr.mxu0 0.0
      %407 = vmatpush1.msra.mxu0 0.0
      %408 = vmatprep.subr.mxu0 0.0
      %409 = vmatpush1.msra.mxu0 0.0
      %410 = vmatprep.subr.mxu0 0.0
      %411 = vmatpush1.msra.mxu0 0.0
      %412 = vmatprep.subr.mxu0 0.0
      %413 = vmatpush1.msra.mxu0 0.0
      %414 = vmatprep.subr.mxu0 0.0
      %415 = vmatpush1.msra.mxu0 0.0
      %416 = vmatprep.subr.mxu0 0.0
      %417 = vmatpush1.msra.mxu0 0.0
      %418 = vmatprep.subr.mxu0 0.0
      %419 = vmatpush1.msra.mxu0 0.0
      %420 = vmatprep.subr.mxu0 0.0
      %421 = vmatpush1.msra.mxu0 0.0
      %422 = vmatprep.subr.mxu0 0.0
      %423 = vmatpush1.msra.mxu0 0.0
      %424 = vmatprep.mubr.f32.mxu0 0.0
      %425 = vmatmul.mubr.f32.gmra.mrb[0].mxu0 %v358
      %v426 = vpop.f32.mrb[0].mxu0
      %v427 = vadd.f32 %v353, %v426
      %v428 = vpop.f32.mrb[0].mxu0
      %v429 = vadd.f32 %v355, %v428
      %430 = vdwg.mxu0
      %s431 = scalar_lea.vmem %s1, 16
      %v432 = vld [vmem:[%s431] sm:$0xff]
      %v434 = vsel %vm282, %v432, 0
      %436 = vmatprep.subr.mxu0 %v246
      %437 = vmatpush1.msra.mxu0 %v245
      %438 = vmatprep.subr.mxu0 0.0
      %439 = vmatpush1.msra.mxu0 0.0
      %440 = vmatprep.subr.mxu0 0.0
      %441 = vmatpush1.msra.mxu0 0.0
      %442 = vmatprep.subr.mxu0 0.0
      %443 = vmatpush1.msra.mxu0 0.0
      %444 = vmatprep.subr.mxu0 0.0
      %445 = vmatpush1.msra.mxu0 0.0
      %446 = vmatprep.subr.mxu0 0.0
      %447 = vmatpush1.msra.mxu0 0.0
      %448 = vmatprep.subr.mxu0 0.0
      %449 = vmatpush1.msra.mxu0 0.0
      %450 = vmatprep.subr.mxu0 0.0
      %451 = vmatpush1.msra.mxu0 0.0
      %452 = vmatprep.subr.mxu0 0.0
      %453 = vmatpush1.msra.mxu0 0.0
      %454 = vmatprep.subr.mxu0 0.0
      %455 = vmatpush1.msra.mxu0 0.0
      %456 = vmatprep.subr.mxu0 0.0
      %457 = vmatpush1.msra.mxu0 0.0
      %458 = vmatprep.subr.mxu0 0.0
      %459 = vmatpush1.msra.mxu0 0.0
      %460 = vmatprep.subr.mxu0 0.0
      %461 = vmatpush1.msra.mxu0 0.0
      %462 = vmatprep.subr.mxu0 0.0
      %463 = vmatpush1.msra.mxu0 0.0
      %464 = vmatprep.subr.mxu0 0.0
      %465 = vmatpush1.msra.mxu0 0.0
      %466 = vmatprep.subr.mxu0 0.0
      %467 = vmatpush1.msra.mxu0 0.0
      %468 = vmatprep.subr.mxu0 0.0
      %469 = vmatpush1.msra.mxu0 0.0
      %470 = vmatprep.subr.mxu0 0.0
      %471 = vmatpush1.msra.mxu0 0.0
      %472 = vmatprep.subr.mxu0 0.0
      %473 = vmatpush1.msra.mxu0 0.0
      %474 = vmatprep.subr.mxu0 0.0
      %475 = vmatpush1.msra.mxu0 0.0
      %476 = vmatprep.subr.mxu0 0.0
      %477 = vmatpush1.msra.mxu0 0.0
      %478 = vmatprep.subr.mxu0 0.0
      %479 = vmatpush1.msra.mxu0 0.0
      %480 = vmatprep.subr.mxu0 0.0
      %481 = vmatpush1.msra.mxu0 0.0
      %482 = vmatprep.subr.mxu0 0.0
      %483 = vmatpush1.msra.mxu0 0.0
      %484 = vmatprep.subr.mxu0 0.0
      %485 = vmatpush1.msra.mxu0 0.0
      %486 = vmatprep.subr.mxu0 0.0
      %487 = vmatpush1.msra.mxu0 0.0
      %488 = vmatprep.subr.mxu0 0.0
      %489 = vmatpush1.msra.mxu0 0.0
      %490 = vmatprep.subr.mxu0 0.0
      %491 = vmatpush1.msra.mxu0 0.0
      %492 = vmatprep.subr.mxu0 0.0
      %493 = vmatpush1.msra.mxu0 0.0
      %494 = vmatprep.subr.mxu0 0.0
      %495 = vmatpush1.msra.mxu0 0.0
      %496 = vmatprep.subr.mxu0 0.0
      %497 = vmatpush1.msra.mxu0 0.0
      %498 = vmatprep.subr.mxu0 0.0
      %499 = vmatpush1.msra.mxu0 0.0
      %500 = vmatprep.mubr.f32.mxu0 0.0
      %501 = vmatmul.mubr.f32.gmra.mrb[0].mxu0 %v434
      %v502 = vpop.f32.mrb[0].mxu0
      %v503 = vadd.f32 0.0, %v502
      %v504 = vpop.f32.mrb[0].mxu0
      %v505 = vadd.f32 0.0, %v504
      %506 = vdwg.mxu0
      %v507 = vadd.f32 %v427, %v503
      %v508 = vadd.f32 %v429, %v505
      %s509 = scalar_lea.vmem %s1, 24
      %v510 = vld [vmem:[%s509] sm:$0xff]
      %v512 = vsel %vm282, %v510, 0
      %514 = vmatprep.subr.mxu0 %v260
      %515 = vmatpush1.msra.mxu0 %v259
      %516 = vmatprep.subr.mxu0 0.0
      %517 = vmatpush1.msra.mxu0 0.0
      %518 = vmatprep.subr.mxu0 0.0
      %519 = vmatpush1.msra.mxu0 0.0
      %520 = vmatprep.subr.mxu0 0.0
      %521 = vmatpush1.msra.mxu0 0.0
      %522 = vmatprep.subr.mxu0 0.0
      %523 = vmatpush1.msra.mxu0 0.0
      %524 = vmatprep.subr.mxu0 0.0
      %525 = vmatpush1.msra.mxu0 0.0
      %526 = vmatprep.subr.mxu0 0.0
      %527 = vmatpush1.msra.mxu0 0.0
      %528 = vmatprep.subr.mxu0 0.0
      %529 = vmatpush1.msra.mxu0 0.0
      %530 = vmatprep.subr.mxu0 0.0
      %531 = vmatpush1.msra.mxu0 0.0
      %532 = vmatprep.subr.mxu0 0.0
      %533 = vmatpush1.msra.mxu0 0.0
      %534 = vmatprep.subr.mxu0 0.0
      %535 = vmatpush1.msra.mxu0 0.0
      %536 = vmatprep.subr.mxu0 0.0
      %537 = vmatpush1.msra.mxu0 0.0
      %538 = vmatprep.subr.mxu0 0.0
      %539 = vmatpush1.msra.mxu0 0.0
      %540 = vmatprep.subr.mxu0 0.0
      %541 = vmatpush1.msra.mxu0 0.0
      %542 = vmatprep.subr.mxu0 0.0
      %543 = vmatpush1.msra.mxu0 0.0
      %544 = vmatprep.subr.mxu0 0.0
      %545 = vmatpush1.msra.mxu0 0.0
      %546 = vmatprep.subr.mxu0 0.0
      %547 = vmatpush1.msra.mxu0 0.0
      %548 = vmatprep.subr.mxu0 0.0
      %549 = vmatpush1.msra.mxu0 0.0
      %550 = vmatprep.subr.mxu0 0.0
      %551 = vmatpush1.msra.mxu0 0.0
      %552 = vmatprep.subr.mxu0 0.0
      %553 = vmatpush1.msra.mxu0 0.0
      %554 = vmatprep.subr.mxu0 0.0
      %555 = vmatpush1.msra.mxu0 0.0
      %556 = vmatprep.subr.mxu0 0.0
      %557 = vmatpush1.msra.mxu0 0.0
      %558 = vmatprep.subr.mxu0 0.0
      %559 = vmatpush1.msra.mxu0 0.0
      %560 = vmatprep.subr.mxu0 0.0
      %561 = vmatpush1.msra.mxu0 0.0
      %562 = vmatprep.subr.mxu0 0.0
      %563 = vmatpush1.msra.mxu0 0.0
      %564 = vmatprep.subr.mxu0 0.0
      %565 = vmatpush1.msra.mxu0 0.0
      %566 = vmatprep.subr.mxu0 0.0
      %567 = vmatpush1.msra.mxu0 0.0
      %568 = vmatprep.subr.mxu0 0.0
      %569 = vmatpush1.msra.mxu0 0.0
      %570 = vmatprep.subr.mxu0 0.0
      %571 = vmatpush1.msra.mxu0 0.0
      %572 = vmatprep.subr.mxu0 0.0
      %573 = vmatpush1.msra.mxu0 0.0
      %574 = vmatprep.subr.mxu0 0.0
      %575 = vmatpush1.msra.mxu0 0.0
      %576 = vmatprep.subr.mxu0 0.0
      %577 = vmatpush1.msra.mxu0 0.0
      %578 = vmatprep.mubr.f32.mxu0 0.0
      %579 = vmatmul.mubr.f32.gmra.mrb[0].mxu0 %v512
      %v580 = vpop.f32.mrb[0].mxu0
      %v581 = vadd.f32 0.0, %v580
      %v582 = vpop.f32.mrb[0].mxu0
      %v583 = vadd.f32 0.0, %v582
      %584 = vdwg.mxu0
      %v585 = vadd.f32 %v507, %v581
      %v586 = vadd.f32 %v508, %v583
      %s587 = scalar_lea.vmem %s1, 32
      %v588 = vld [vmem:[%s587] sm:$0xff]
      %v590 = vsel %vm282, %v588, 0
      %592 = vmatprep.subr.mxu0 %v172
      %593 = vmatpush1.msra.mxu0 %v171
      %594 = vmatprep.subr.mxu0 0.0
      %595 = vmatpush1.msra.mxu0 0.0
      %596 = vmatprep.subr.mxu0 0.0
      %597 = vmatpush1.msra.mxu0 0.0
      %598 = vmatprep.subr.mxu0 0.0
      %599 = vmatpush1.msra.mxu0 0.0
      %600 = vmatprep.subr.mxu0 0.0
      %601 = vmatpush1.msra.mxu0 0.0
      %602 = vmatprep.subr.mxu0 0.0
      %603 = vmatpush1.msra.mxu0 0.0
      %604 = vmatprep.subr.mxu0 0.0
      %605 = vmatpush1.msra.mxu0 0.0
      %606 = vmatprep.subr.mxu0 0.0
      %607 = vmatpush1.msra.mxu0 0.0
      %608 = vmatprep.subr.mxu0 0.0
      %609 = vmatpush1.msra.mxu0 0.0
      %610 = vmatprep.subr.mxu0 0.0
      %611 = vmatpush1.msra.mxu0 0.0
      %612 = vmatprep.subr.mxu0 0.0
      %613 = vmatpush1.msra.mxu0 0.0
      %614 = vmatprep.subr.mxu0 0.0
      %615 = vmatpush1.msra.mxu0 0.0
      %616 = vmatprep.subr.mxu0 0.0
      %617 = vmatpush1.msra.mxu0 0.0
      %618 = vmatprep.subr.mxu0 0.0
      %619 = vmatpush1.msra.mxu0 0.0
      %620 = vmatprep.subr.mxu0 0.0
      %621 = vmatpush1.msra.mxu0 0.0
      %622 = vmatprep.subr.mxu0 0.0
      %623 = vmatpush1.msra.mxu0 0.0
      %624 = vmatprep.subr.mxu0 0.0
      %625 = vmatpush1.msra.mxu0 0.0
      %626 = vmatprep.subr.mxu0 0.0
      %627 = vmatpush1.msra.mxu0 0.0
      %628 = vmatprep.subr.mxu0 0.0
      %629 = vmatpush1.msra.mxu0 0.0
      %630 = vmatprep.subr.mxu0 0.0
      %631 = vmatpush1.msra.mxu0 0.0
      %632 = vmatprep.subr.mxu0 0.0
      %633 = vmatpush1.msra.mxu0 0.0
      %634 = vmatprep.subr.mxu0 0.0
      %635 = vmatpush1.msra.mxu0 0.0
      %636 = vmatprep.subr.mxu0 0.0
      %637 = vmatpush1.msra.mxu0 0.0
      %638 = vmatprep.subr.mxu0 0.0
      %639 = vmatpush1.msra.mxu0 0.0
      %640 = vmatprep.subr.mxu0 0.0
      %641 = vmatpush1.msra.mxu0 0.0
      %642 = vmatprep.subr.mxu0 0.0
      %643 = vmatpush1.msra.mxu0 0.0
      %644 = vmatprep.subr.mxu0 0.0
      %645 = vmatpush1.msra.mxu0 0.0
      %646 = vmatprep.subr.mxu0 0.0
      %647 = vmatpush1.msra.mxu0 0.0
      %648 = vmatprep.subr.mxu0 0.0
      %649 = vmatpush1.msra.mxu0 0.0
      %650 = vmatprep.subr.mxu0 0.0
      %651 = vmatpush1.msra.mxu0 0.0
      %652 = vmatprep.subr.mxu0 0.0
      %653 = vmatpush1.msra.mxu0 0.0
      %654 = vmatprep.subr.mxu0 0.0
      %655 = vmatpush1.msra.mxu0 0.0
      %656 = vmatprep.mubr.f32.mxu0 0.0
      %657 = vmatmul.mubr.f32.gmra.mrb[0].mxu0 %v590
      %v658 = vpop.f32.mrb[0].mxu0
      %v659 = vadd.f32 0.0, %v658
      %v660 = vpop.f32.mrb[0].mxu0
      %v661 = vadd.f32 0.0, %v660
      %662 = vdwg.mxu0
      %v663 = vadd.f32 %v585, %v659
      %v664 = vadd.f32 %v586, %v661
      %s665 = scalar_lea.vmem %s1, 40
      %v666 = vld [vmem:[%s665] sm:$0xff]
      %v668 = vsel %vm282, %v666, 0
      %670 = vmatprep.subr.mxu0 %v262
      %671 = vmatpush1.msra.mxu0 %v261
      %672 = vmatprep.subr.mxu0 0.0
      %673 = vmatpush1.msra.mxu0 0.0
      %674 = vmatprep.subr.mxu0 0.0
      %675 = vmatpush1.msra.mxu0 0.0
      %676 = vmatprep.subr.mxu0 0.0
      %677 = vmatpush1.msra.mxu0 0.0
      %678 = vmatprep.subr.mxu0 0.0
      %679 = vmatpush1.msra.mxu0 0.0
      %680 = vmatprep.subr.mxu0 0.0
      %681 = vmatpush1.msra.mxu0 0.0
      %682 = vmatprep.subr.mxu0 0.0
      %683 = vmatpush1.msra.mxu0 0.0
      %684 = vmatprep.subr.mxu0 0.0
      %685 = vmatpush1.msra.mxu0 0.0
      %686 = vmatprep.subr.mxu0 0.0
      %687 = vmatpush1.msra.mxu0 0.0
      %688 = vmatprep.subr.mxu0 0.0
      %689 = vmatpush1.msra.mxu0 0.0
      %690 = vmatprep.subr.mxu0 0.0
      %691 = vmatpush1.msra.mxu0 0.0
      %692 = vmatprep.subr.mxu0 0.0
      %693 = vmatpush1.msra.mxu0 0.0
      %694 = vmatprep.subr.mxu0 0.0
      %695 = vmatpush1.msra.mxu0 0.0
      %696 = vmatprep.subr.mxu0 0.0
      %697 = vmatpush1.msra.mxu0 0.0
      %698 = vmatprep.subr.mxu0 0.0
      %699 = vmatpush1.msra.mxu0 0.0
      %700 = vmatprep.subr.mxu0 0.0
      %701 = vmatpush1.msra.mxu0 0.0
      %702 = vmatprep.subr.mxu0 0.0
      %703 = vmatpush1.msra.mxu0 0.0
      %704 = vmatprep.subr.mxu0 0.0
      %705 = vmatpush1.msra.mxu0 0.0
      %706 = vmatprep.subr.mxu0 0.0
      %707 = vmatpush1.msra.mxu0 0.0
      %708 = vmatprep.subr.mxu0 0.0
      %709 = vmatpush1.msra.mxu0 0.0
      %710 = vmatprep.subr.mxu0 0.0
      %711 = vmatpush1.msra.mxu0 0.0
      %712 = vmatprep.subr.mxu0 0.0
      %713 = vmatpush1.msra.mxu0 0.0
      %714 = vmatprep.subr.mxu0 0.0
      %715 = vmatpush1.msra.mxu0 0.0
      %716 = vmatprep.subr.mxu0 0.0
      %717 = vmatpush1.msra.mxu0 0.0
      %718 = vmatprep.subr.mxu0 0.0
      %719 = vmatpush1.msra.mxu0 0.0
      %720 = vmatprep.subr.mxu0 0.0
      %721 = vmatpush1.msra.mxu0 0.0
      %722 = vmatprep.subr.mxu0 0.0
      %723 = vmatpush1.msra.mxu0 0.0
      %724 = vmatprep.subr.mxu0 0.0
      %725 = vmatpush1.msra.mxu0 0.0
      %726 = vmatprep.subr.mxu0 0.0
      %727 = vmatpush1.msra.mxu0 0.0
      %728 = vmatprep.subr.mxu0 0.0
      %729 = vmatpush1.msra.mxu0 0.0
      %730 = vmatprep.subr.mxu0 0.0
      %731 = vmatpush1.msra.mxu0 0.0
      %732 = vmatprep.subr.mxu0 0.0
      %733 = vmatpush1.msra.mxu0 0.0
      %734 = vmatprep.mubr.f32.mxu0 0.0
      %735 = vmatmul.mubr.f32.gmra.mrb[0].mxu0 %v668
      %v736 = vpop.f32.mrb[0].mxu0
      %v737 = vadd.f32 0.0, %v736
      %v738 = vpop.f32.mrb[0].mxu0
      %v739 = vadd.f32 0.0, %v738
      %740 = vdwg.mxu0
      %v741 = vadd.f32 %v663, %v737
      %v742 = vadd.f32 %v664, %v739
      %s743 = scalar_lea.vmem %s1, 48
      %v744 = vld [vmem:[%s743] sm:$0xff]
      %v746 = vsel %vm282, %v744, 0
      %748 = vmatprep.subr.mxu0 %v276
      %749 = vmatpush1.msra.mxu0 %v275
      %750 = vmatprep.subr.mxu0 0.0
      %751 = vmatpush1.msra.mxu0 0.0
      %752 = vmatprep.subr.mxu0 0.0
      %753 = vmatpush1.msra.mxu0 0.0
      %754 = vmatprep.subr.mxu0 0.0
      %755 = vmatpush1.msra.mxu0 0.0
      %756 = vmatprep.subr.mxu0 0.0
      %757 = vmatpush1.msra.mxu0 0.0
      %758 = vmatprep.subr.mxu0 0.0
      %759 = vmatpush1.msra.mxu0 0.0
      %760 = vmatprep.subr.mxu0 0.0
      %761 = vmatpush1.msra.mxu0 0.0
      %762 = vmatprep.subr.mxu0 0.0
      %763 = vmatpush1.msra.mxu0 0.0
      %764 = vmatprep.subr.mxu0 0.0
      %765 = vmatpush1.msra.mxu0 0.0
      %766 = vmatprep.subr.mxu0 0.0
      %767 = vmatpush1.msra.mxu0 0.0
      %768 = vmatprep.subr.mxu0 0.0
      %769 = vmatpush1.msra.mxu0 0.0
      %770 = vmatprep.subr.mxu0 0.0
      %771 = vmatpush1.msra.mxu0 0.0
      %772 = vmatprep.subr.mxu0 0.0
      %773 = vmatpush1.msra.mxu0 0.0
      %774 = vmatprep.subr.mxu0 0.0
      %775 = vmatpush1.msra.mxu0 0.0
      %776 = vmatprep.subr.mxu0 0.0
      %777 = vmatpush1.msra.mxu0 0.0
      %778 = vmatprep.subr.mxu0 0.0
      %779 = vmatpush1.msra.mxu0 0.0
      %780 = vmatprep.subr.mxu0 0.0
      %781 = vmatpush1.msra.mxu0 0.0
      %782 = vmatprep.subr.mxu0 0.0
      %783 = vmatpush1.msra.mxu0 0.0
      %784 = vmatprep.subr.mxu0 0.0
      %785 = vmatpush1.msra.mxu0 0.0
      %786 = vmatprep.subr.mxu0 0.0
      %787 = vmatpush1.msra.mxu0 0.0
      %788 = vmatprep.subr.mxu0 0.0
      %789 = vmatpush1.msra.mxu0 0.0
      %790 = vmatprep.subr.mxu0 0.0
      %791 = vmatpush1.msra.mxu0 0.0
      %792 = vmatprep.subr.mxu0 0.0
      %793 = vmatpush1.msra.mxu0 0.0
      %794 = vmatprep.subr.mxu0 0.0
      %795 = vmatpush1.msra.mxu0 0.0
      %796 = vmatprep.subr.mxu0 0.0
      %797 = vmatpush1.msra.mxu0 0.0
      %798 = vmatprep.subr.mxu0 0.0
      %799 = vmatpush1.msra.mxu0 0.0
      %800 = vmatprep.subr.mxu0 0.0
      %801 = vmatpush1.msra.mxu0 0.0
      %802 = vmatprep.subr.mxu0 0.0
      %803 = vmatpush1.msra.mxu0 0.0
      %804 = vmatprep.subr.mxu0 0.0
      %805 = vmatpush1.msra.mxu0 0.0
      %806 = vmatprep.subr.mxu0 0.0
      %807 = vmatpush1.msra.mxu0 0.0
      %808 = vmatprep.subr.mxu0 0.0
      %809 = vmatpush1.msra.mxu0 0.0
      %810 = vmatprep.subr.mxu0 0.0
      %811 = vmatpush1.msra.mxu0 0.0
      %812 = vmatprep.mubr.f32.mxu0 0.0
      %813 = vmatmul.mubr.f32.gmra.mrb[0].mxu0 %v746
      %v814 = vpop.f32.mrb[0].mxu0
      %v815 = vadd.f32 0.0, %v814
      %v816 = vpop.f32.mrb[0].mxu0
      %v817 = vadd.f32 0.0, %v816
      %818 = vdwg.mxu0
      %v819 = vadd.f32 %v741, %v815
      %v820 = vadd.f32 %v742, %v817
      %s821 = scalar_lea.vmem %s1, 56
      %v822 = vld [vmem:[%s821] sm:$0xff]
      %v824 = vsel %vm282, %v822, 0
      %826 = vmatprep.subr.mxu0 %v228
      %827 = vmatpush1.msra.mxu0 %v227
      %828 = vmatprep.subr.mxu0 0.0
      %829 = vmatpush1.msra.mxu0 0.0
      %830 = vmatprep.subr.mxu0 0.0
      %831 = vmatpush1.msra.mxu0 0.0
      %832 = vmatprep.subr.mxu0 0.0
      %833 = vmatpush1.msra.mxu0 0.0
      %834 = vmatprep.subr.mxu0 0.0
      %835 = vmatpush1.msra.mxu0 0.0
      %836 = vmatprep.subr.mxu0 0.0
      %837 = vmatpush1.msra.mxu0 0.0
      %838 = vmatprep.subr.mxu0 0.0
      %839 = vmatpush1.msra.mxu0 0.0
      %840 = vmatprep.subr.mxu0 0.0
      %841 = vmatpush1.msra.mxu0 0.0
      %842 = vmatprep.subr.mxu0 0.0
      %843 = vmatpush1.msra.mxu0 0.0
      %844 = vmatprep.subr.mxu0 0.0
      %845 = vmatpush1.msra.mxu0 0.0
      %846 = vmatprep.subr.mxu0 0.0
      %847 = vmatpush1.msra.mxu0 0.0
      %848 = vmatprep.subr.mxu0 0.0
      %849 = vmatpush1.msra.mxu0 0.0
      %850 = vmatprep.subr.mxu0 0.0
      %851 = vmatpush1.msra.mxu0 0.0
      %852 = vmatprep.subr.mxu0 0.0
      %853 = vmatpush1.msra.mxu0 0.0
      %854 = vmatprep.subr.mxu0 0.0
      %855 = vmatpush1.msra.mxu0 0.0
      %856 = vmatprep.subr.mxu0 0.0
      %857 = vmatpush1.msra.mxu0 0.0
      %858 = vmatprep.subr.mxu0 0.0
      %859 = vmatpush1.msra.mxu0 0.0
      %860 = vmatprep.subr.mxu0 0.0
      %861 = vmatpush1.msra.mxu0 0.0
      %862 = vmatprep.subr.mxu0 0.0
      %863 = vmatpush1.msra.mxu0 0.0
      %864 = vmatprep.subr.mxu0 0.0
      %865 = vmatpush1.msra.mxu0 0.0
      %866 = vmatprep.subr.mxu0 0.0
      %867 = vmatpush1.msra.mxu0 0.0
      %868 = vmatprep.subr.mxu0 0.0
      %869 = vmatpush1.msra.mxu0 0.0
      %870 = vmatprep.subr.mxu0 0.0
      %871 = vmatpush1.msra.mxu0 0.0
      %872 = vmatprep.subr.mxu0 0.0
      %873 = vmatpush1.msra.mxu0 0.0
      %874 = vmatprep.subr.mxu0 0.0
      %875 = vmatpush1.msra.mxu0 0.0
      %876 = vmatprep.subr.mxu0 0.0
      %877 = vmatpush1.msra.mxu0 0.0
      %878 = vmatprep.subr.mxu0 0.0
      %879 = vmatpush1.msra.mxu0 0.0
      %880 = vmatprep.subr.mxu0 0.0
      %881 = vmatpush1.msra.mxu0 0.0
      %882 = vmatprep.subr.mxu0 0.0
      %883 = vmatpush1.msra.mxu0 0.0
      %884 = vmatprep.subr.mxu0 0.0
      %885 = vmatpush1.msra.mxu0 0.0
      %886 = vmatprep.subr.mxu0 0.0
      %887 = vmatpush1.msra.mxu0 0.0
      %888 = vmatprep.subr.mxu0 0.0
      %889 = vmatpush1.msra.mxu0 0.0
      %890 = vmatprep.mubr.f32.mxu0 0.0
      %891 = vmatmul.mubr.f32.gmra.mrb[0].mxu0 %v824
      %v892 = vpop.f32.mrb[0].mxu0
      %v893 = vadd.f32 0.0, %v892
      %v894 = vpop.f32.mrb[0].mxu0
      %v895 = vadd.f32 0.0, %v894
      %896 = vdwg.mxu0
      %v897 = vadd.f32 %v819, %v893
      %v898 = vadd.f32 %v820, %v895
      %s899 = scalar_lea.vmem %s1, 64
      %v900 = vld [vmem:[%s899] sm:$0xff]
      %v902 = vsel %vm282, %v900, 0
      %904 = vmatprep.subr.mxu0 %v278
      %905 = vmatpush1.msra.mxu0 %v277
      %906 = vmatprep.subr.mxu0 0.0
      %907 = vmatpush1.msra.mxu0 0.0
      %908 = vmatprep.subr.mxu0 0.0
      %909 = vmatpush1.msra.mxu0 0.0
      %910 = vmatprep.subr.mxu0 0.0
      %911 = vmatpush1.msra.mxu0 0.0
      %912 = vmatprep.subr.mxu0 0.0
      %913 = vmatpush1.msra.mxu0 0.0
      %914 = vmatprep.subr.mxu0 0.0
      %915 = vmatpush1.msra.mxu0 0.0
      %916 = vmatprep.subr.mxu0 0.0
      %917 = vmatpush1.msra.mxu0 0.0
      %918 = vmatprep.subr.mxu0 0.0
      %919 = vmatpush1.msra.mxu0 0.0
      %920 = vmatprep.subr.mxu0 0.0
      %921 = vmatpush1.msra.mxu0 0.0
      %922 = vmatprep.subr.mxu0 0.0
      %923 = vmatpush1.msra.mxu0 0.0
      %924 = vmatprep.subr.mxu0 0.0
      %925 = vmatpush1.msra.mxu0 0.0
      %926 = vmatprep.subr.mxu0 0.0
      %927 = vmatpush1.msra.mxu0 0.0
      %928 = vmatprep.subr.mxu0 0.0
      %929 = vmatpush1.msra.mxu0 0.0
      %930 = vmatprep.subr.mxu0 0.0
      %931 = vmatpush1.msra.mxu0 0.0
      %932 = vmatprep.subr.mxu0 0.0
      %933 = vmatpush1.msra.mxu0 0.0
      %934 = vmatprep.subr.mxu0 0.0
      %935 = vmatpush1.msra.mxu0 0.0
      %936 = vmatprep.subr.mxu0 0.0
      %937 = vmatpush1.msra.mxu0 0.0
      %938 = vmatprep.subr.mxu0 0.0
      %939 = vmatpush1.msra.mxu0 0.0
      %940 = vmatprep.subr.mxu0 0.0
      %941 = vmatpush1.msra.mxu0 0.0
      %942 = vmatprep.subr.mxu0 0.0
      %943 = vmatpush1.msra.mxu0 0.0
      %944 = vmatprep.subr.mxu0 0.0
      %945 = vmatpush1.msra.mxu0 0.0
      %946 = vmatprep.subr.mxu0 0.0
      %947 = vmatpush1.msra.mxu0 0.0
      %948 = vmatprep.subr.mxu0 0.0
      %949 = vmatpush1.msra.mxu0 0.0
      %950 = vmatprep.subr.mxu0 0.0
      %951 = vmatpush1.msra.mxu0 0.0
      %952 = vmatprep.subr.mxu0 0.0
      %953 = vmatpush1.msra.mxu0 0.0
      %954 = vmatprep.subr.mxu0 0.0
      %955 = vmatpush1.msra.mxu0 0.0
      %956 = vmatprep.subr.mxu0 0.0
      %957 = vmatpush1.msra.mxu0 0.0
      %958 = vmatprep.subr.mxu0 0.0
      %959 = vmatpush1.msra.mxu0 0.0
      %960 = vmatprep.subr.mxu0 0.0
      %961 = vmatpush1.msra.mxu0 0.0
      %962 = vmatprep.subr.mxu0 0.0
      %963 = vmatpush1.msra.mxu0 0.0
      %964 = vmatprep.subr.mxu0 0.0
      %965 = vmatpush1.msra.mxu0 0.0
      %966 = vmatprep.subr.mxu0 0.0
      %967 = vmatpush1.msra.mxu0 0.0
      %968 = vmatprep.mubr.f32.mxu0 0.0
      %969 = vmatmul.mubr.f32.gmra.mrb[0].mxu0 %v902
      %v970 = vpop.f32.mrb[0].mxu0
      %v971 = vadd.f32 0.0, %v970
      %v972 = vpop.f32.mrb[0].mxu0
      %v973 = vadd.f32 0.0, %v972
      %974 = vdwg.mxu0
      %v975 = vadd.f32 %v897, %v971
      %v976 = vadd.f32 %v898, %v973
      %v977 = vadd.f32 %v975, %v976
      %978 = vadd.xlane.f32.xlu0 %v977
      %v979 = vpop.xlane.xlu0 %978
      %v980 = vmul.f32 %v979, 0.00390625
      %v981 = vsub.f32 %v975, %v980
      %v982 = vsub.f32 %v976, %v980
      %v983 = vmul.f32 %v981, %v981
      %v984 = vmul.f32 %v982, %v982
      %v985 = vadd.f32 %v983, %v984
      %986 = vadd.xlane.f32.xlu0 %v985
      %v987 = vpop.xlane.xlu0 %986
      %v988 = vmul.f32 %v987, 0.00390625
      %v989 = vadd.f32 %v988, 1e-05
      %v990 = vrsqrt.pop %v989
      %v991 = vmul.f32 %v981, %v990
      %v992 = vmul.f32 %v982, %v990
      %v993 = vmax.f32 %v991, 0.0
      %v994 = vmax.f32 %v992, 0.0
      %995 = vrot.lane.b32.xlu0 %v993, 16
      %v996 = vpop.permute.xlu0 %995
      %997 = vrot.lane.b32.xlu0 %v994, 16
      %v998 = vpop.permute.xlu0 %997
      %v999 = vsel %vm200, %v996, %v998
      %v1000 = vsel %vm200, %v998, %v996
      %1001 = vrot.lane.b32.xlu0 %v993, 112
      %v1002 = vpop.permute.xlu0 %1001
      %1003 = vrot.lane.b32.xlu0 %v994, 112
      %v1004 = vpop.permute.xlu0 %1003
      %v1005 = vsel %vm222, %v1002, %v1004
      %v1006 = vsel %vm222, %v1004, %v1002
      %v1007 = vsel %vm200, %v1005, %v1000
      %v1008 = vsel %vm201, %v1006, %v999
      %v1009 = vsel %vm206, %v1000, %v1005
      %v1010 = vsel %vm207, %v999, %v1006
      %1011 = vrot.lane.b32.xlu0 %v1007, 1
      %v1012 = vpop.permute.xlu0 %1011
      %1013 = vrot.lane.b32.xlu0 %v1008, 1
      %v1014 = vpop.permute.xlu0 %1013
      %v1015 = vsel %vm233, %v1012, %v1014
      %v1016 = vsel %vm233, %v1014, %v1012
      %1017 = vrot.lane.b32.xlu0 %v1007, 127
      %v1018 = vpop.permute.xlu0 %1017
      %1019 = vrot.lane.b32.xlu0 %v1008, 127
      %v1020 = vpop.permute.xlu0 %1019
      %v1021 = vsel %vm240, %v1018, %v1020
      %v1022 = vsel %vm240, %v1020, %v1018
      %v1023 = vsel %vm208, %v1021, %v1016
      %v1024 = vsel %vm209, %v1022, %v1015
      %v1025 = vsel %vm210, %v1016, %v1021
      %v1026 = vsel %vm211, %v1015, %v1022
      %1027 = vrot.lane.b32.xlu0 %v993, 1
      %v1028 = vpop.permute.xlu0 %1027
      %1029 = vrot.lane.b32.xlu0 %v994, 1
      %v1030 = vpop.permute.xlu0 %1029
      %v1031 = vsel %vm233, %v1028, %v1030
      %v1032 = vsel %vm233, %v1030, %v1028
      %1033 = vrot.lane.b32.xlu0 %v993, 127
      %v1034 = vpop.permute.xlu0 %1033
      %1035 = vrot.lane.b32.xlu0 %v994, 127
      %v1036 = vpop.permute.xlu0 %1035
      %v1037 = vsel %vm240, %v1034, %v1036
      %v1038 = vsel %vm240, %v1036, %v1034
      %v1039 = vsel %vm208, %v1037, %v1032
      %v1040 = vsel %vm209, %v1038, %v1031
      %v1041 = vsel %vm210, %v1032, %v1037
      %v1042 = vsel %vm211, %v1031, %v1038
      %1043 = vrot.lane.b32.xlu0 %v1009, 1
      %v1044 = vpop.permute.xlu0 %1043
      %1045 = vrot.lane.b32.xlu0 %v1010, 1
      %v1046 = vpop.permute.xlu0 %1045
      %v1047 = vsel %vm233, %v1044, %v1046
      %v1048 = vsel %vm233, %v1046, %v1044
      %1049 = vrot.lane.b32.xlu0 %v1009, 127
      %v1050 = vpop.permute.xlu0 %1049
      %1051 = vrot.lane.b32.xlu0 %v1010, 127
      %v1052 = vpop.permute.xlu0 %1051
      %v1053 = vsel %vm240, %v1050, %v1052
      %v1054 = vsel %vm240, %v1052, %v1050
      %v1055 = vsel %vm208, %v1053, %v1048
      %v1056 = vsel %vm209, %v1054, %v1047
      %v1057 = vsel %vm210, %v1048, %v1053
      %v1058 = vsel %vm211, %v1047, %v1054
      %v1059 = vld [vmem:[%s2] sm:$0xff]
      %s1060 = scalar_lea.vmem %s2, 8
      %v1061 = vld [vmem:[%s1060] sm:$0xff]
      %v1063 = vsel %vm282, %v1061, 0
      %1065 = vmatprep.subr.mxu0 %v1008
      %1066 = vmatpush1.msra.mxu0 %v1007
      %1067 = vmatprep.subr.mxu0 0.0
      %1068 = vmatpush1.msra.mxu0 0.0
      %1069 = vmatprep.subr.mxu0 0.0
      %1070 = vmatpush1.msra.mxu0 0.0
      %1071 = vmatprep.subr.mxu0 0.0
      %1072 = vmatpush1.msra.mxu0 0.0
      %1073 = vmatprep.subr.mxu0 0.0
      %1074 = vmatpush1.msra.mxu0 0.0
      %1075 = vmatprep.subr.mxu0 0.0
      %1076 = vmatpush1.msra.mxu0 0.0
      %1077 = vmatprep.subr.mxu0 0.0
      %1078 = vmatpush1.msra.mxu0 0.0
      %1079 = vmatprep.subr.mxu0 0.0
      %1080 = vmatpush1.msra.mxu0 0.0
      %1081 = vmatprep.subr.mxu0 0.0
      %1082 = vmatpush1.msra.mxu0 0.0
      %1083 = vmatprep.subr.mxu0 0.0
      %1084 = vmatpush1.msra.mxu0 0.0
      %1085 = vmatprep.subr.mxu0 0.0
      %1086 = vmatpush1.msra.mxu0 0.0
      %1087 = vmatprep.subr.mxu0 0.0
      %1088 = vmatpush1.msra.mxu0 0.0
      %1089 = vmatprep.subr.mxu0 0.0
      %1090 = vmatpush1.msra.mxu0 0.0
      %1091 = vmatprep.subr.mxu0 0.0
      %1092 = vmatpush1.msra.mxu0 0.0
      %1093 = vmatprep.subr.mxu0 0.0
      %1094 = vmatpush1.msra.mxu0 0.0
      %1095 = vmatprep.subr.mxu0 0.0
      %1096 = vmatpush1.msra.mxu0 0.0
      %1097 = vmatprep.subr.mxu0 0.0
      %1098 = vmatpush1.msra.mxu0 0.0
      %1099 = vmatprep.subr.mxu0 0.0
      %1100 = vmatpush1.msra.mxu0 0.0
      %1101 = vmatprep.subr.mxu0 0.0
      %1102 = vmatpush1.msra.mxu0 0.0
      %1103 = vmatprep.subr.mxu0 0.0
      %1104 = vmatpush1.msra.mxu0 0.0
      %1105 = vmatprep.subr.mxu0 0.0
      %1106 = vmatpush1.msra.mxu0 0.0
      %1107 = vmatprep.subr.mxu0 0.0
      %1108 = vmatpush1.msra.mxu0 0.0
      %1109 = vmatprep.subr.mxu0 0.0
      %1110 = vmatpush1.msra.mxu0 0.0
      %1111 = vmatprep.subr.mxu0 0.0
      %1112 = vmatpush1.msra.mxu0 0.0
      %1113 = vmatprep.subr.mxu0 0.0
      %1114 = vmatpush1.msra.mxu0 0.0
      %1115 = vmatprep.subr.mxu0 0.0
      %1116 = vmatpush1.msra.mxu0 0.0
      %1117 = vmatprep.subr.mxu0 0.0
      %1118 = vmatpush1.msra.mxu0 0.0
      %1119 = vmatprep.subr.mxu0 0.0
      %1120 = vmatpush1.msra.mxu0 0.0
      %1121 = vmatprep.subr.mxu0 0.0
      %1122 = vmatpush1.msra.mxu0 0.0
      %1123 = vmatprep.subr.mxu0 0.0
      %1124 = vmatpush1.msra.mxu0 0.0
      %1125 = vmatprep.subr.mxu0 0.0
      %1126 = vmatpush1.msra.mxu0 0.0
      %1127 = vmatprep.subr.mxu0 0.0
      %1128 = vmatpush1.msra.mxu0 0.0
      %1129 = vmatprep.mubr.f32.mxu0 0.0
      %1130 = vmatmul.mubr.f32.gmra.mrb[0].mxu0 %v1063
      %v1131 = vpop.f32.mrb[0].mxu0
      %v1132 = vadd.f32 0.0, %v1131
      %v1133 = vpop.f32.mrb[0].mxu0
      %v1134 = vadd.f32 0.0, %v1133
      %1135 = vdwg.mxu0
      %v1137 = vsel %vm282, %v1059, 0
      %1139 = vmatprep.subr.mxu0 %v1024
      %1140 = vmatpush1.msra.mxu0 %v1023
      %1141 = vmatprep.subr.mxu0 0.0
      %1142 = vmatpush1.msra.mxu0 0.0
      %1143 = vmatprep.subr.mxu0 0.0
      %1144 = vmatpush1.msra.mxu0 0.0
      %1145 = vmatprep.subr.mxu0 0.0
      %1146 = vmatpush1.msra.mxu0 0.0
      %1147 = vmatprep.subr.mxu0 0.0
      %1148 = vmatpush1.msra.mxu0 0.0
      %1149 = vmatprep.subr.mxu0 0.0
      %1150 = vmatpush1.msra.mxu0 0.0
      %1151 = vmatprep.subr.mxu0 0.0
      %1152 = vmatpush1.msra.mxu0 0.0
      %1153 = vmatprep.subr.mxu0 0.0
      %1154 = vmatpush1.msra.mxu0 0.0
      %1155 = vmatprep.subr.mxu0 0.0
      %1156 = vmatpush1.msra.mxu0 0.0
      %1157 = vmatprep.subr.mxu0 0.0
      %1158 = vmatpush1.msra.mxu0 0.0
      %1159 = vmatprep.subr.mxu0 0.0
      %1160 = vmatpush1.msra.mxu0 0.0
      %1161 = vmatprep.subr.mxu0 0.0
      %1162 = vmatpush1.msra.mxu0 0.0
      %1163 = vmatprep.subr.mxu0 0.0
      %1164 = vmatpush1.msra.mxu0 0.0
      %1165 = vmatprep.subr.mxu0 0.0
      %1166 = vmatpush1.msra.mxu0 0.0
      %1167 = vmatprep.subr.mxu0 0.0
      %1168 = vmatpush1.msra.mxu0 0.0
      %1169 = vmatprep.subr.mxu0 0.0
      %1170 = vmatpush1.msra.mxu0 0.0
      %1171 = vmatprep.subr.mxu0 0.0
      %1172 = vmatpush1.msra.mxu0 0.0
      %1173 = vmatprep.subr.mxu0 0.0
      %1174 = vmatpush1.msra.mxu0 0.0
      %1175 = vmatprep.subr.mxu0 0.0
      %1176 = vmatpush1.msra.mxu0 0.0
      %1177 = vmatprep.subr.mxu0 0.0
      %1178 = vmatpush1.msra.mxu0 0.0
      %1179 = vmatprep.subr.mxu0 0.0
      %1180 = vmatpush1.msra.mxu0 0.0
      %1181 = vmatprep.subr.mxu0 0.0
      %1182 = vmatpush1.msra.mxu0 0.0
      %1183 = vmatprep.subr.mxu0 0.0
      %1184 = vmatpush1.msra.mxu0 0.0
      %1185 = vmatprep.subr.mxu0 0.0
      %1186 = vmatpush1.msra.mxu0 0.0
      %1187 = vmatprep.subr.mxu0 0.0
      %1188 = vmatpush1.msra.mxu0 0.0
      %1189 = vmatprep.subr.mxu0 0.0
      %1190 = vmatpush1.msra.mxu0 0.0
      %1191 = vmatprep.subr.mxu0 0.0
      %1192 = vmatpush1.msra.mxu0 0.0
      %1193 = vmatprep.subr.mxu0 0.0
      %1194 = vmatpush1.msra.mxu0 0.0
      %1195 = vmatprep.subr.mxu0 0.0
      %1196 = vmatpush1.msra.mxu0 0.0
      %1197 = vmatprep.subr.mxu0 0.0
      %1198 = vmatpush1.msra.mxu0 0.0
      %1199 = vmatprep.subr.mxu0 0.0
      %1200 = vmatpush1.msra.mxu0 0.0
      %1201 = vmatprep.subr.mxu0 0.0
      %1202 = vmatpush1.msra.mxu0 0.0
      %1203 = vmatprep.mubr.f32.mxu0 0.0
      %1204 = vmatmul.mubr.f32.gmra.mrb[0].mxu0 %v1137
      %v1205 = vpop.f32.mrb[0].mxu0
      %v1206 = vadd.f32 %v1132, %v1205
      %v1207 = vpop.f32.mrb[0].mxu0
      %v1208 = vadd.f32 %v1134, %v1207
      %1209 = vdwg.mxu0
      %s1210 = scalar_lea.vmem %s2, 16
      %v1211 = vld [vmem:[%s1210] sm:$0xff]
      %v1213 = vsel %vm282, %v1211, 0
      %1215 = vmatprep.subr.mxu0 %v1026
      %1216 = vmatpush1.msra.mxu0 %v1025
      %1217 = vmatprep.subr.mxu0 0.0
      %1218 = vmatpush1.msra.mxu0 0.0
      %1219 = vmatprep.subr.mxu0 0.0
      %1220 = vmatpush1.msra.mxu0 0.0
      %1221 = vmatprep.subr.mxu0 0.0
      %1222 = vmatpush1.msra.mxu0 0.0
      %1223 = vmatprep.subr.mxu0 0.0
      %1224 = vmatpush1.msra.mxu0 0.0
      %1225 = vmatprep.subr.mxu0 0.0
      %1226 = vmatpush1.msra.mxu0 0.0
      %1227 = vmatprep.subr.mxu0 0.0
      %1228 = vmatpush1.msra.mxu0 0.0
      %1229 = vmatprep.subr.mxu0 0.0
      %1230 = vmatpush1.msra.mxu0 0.0
      %1231 = vmatprep.subr.mxu0 0.0
      %1232 = vmatpush1.msra.mxu0 0.0
      %1233 = vmatprep.subr.mxu0 0.0
      %1234 = vmatpush1.msra.mxu0 0.0
      %1235 = vmatprep.subr.mxu0 0.0
      %1236 = vmatpush1.msra.mxu0 0.0
      %1237 = vmatprep.subr.mxu0 0.0
      %1238 = vmatpush1.msra.mxu0 0.0
      %1239 = vmatprep.subr.mxu0 0.0
      %1240 = vmatpush1.msra.mxu0 0.0
      %1241 = vmatprep.subr.mxu0 0.0
      %1242 = vmatpush1.msra.mxu0 0.0
      %1243 = vmatprep.subr.mxu0 0.0
      %1244 = vmatpush1.msra.mxu0 0.0
      %1245 = vmatprep.subr.mxu0 0.0
      %1246 = vmatpush1.msra.mxu0 0.0
      %1247 = vmatprep.subr.mxu0 0.0
      %1248 = vmatpush1.msra.mxu0 0.0
      %1249 = vmatprep.subr.mxu0 0.0
      %1250 = vmatpush1.msra.mxu0 0.0
      %1251 = vmatprep.subr.mxu0 0.0
      %1252 = vmatpush1.msra.mxu0 0.0
      %1253 = vmatprep.subr.mxu0 0.0
      %1254 = vmatpush1.msra.mxu0 0.0
      %1255 = vmatprep.subr.mxu0 0.0
      %1256 = vmatpush1.msra.mxu0 0.0
      %1257 = vmatprep.subr.mxu0 0.0
      %1258 = vmatpush1.msra.mxu0 0.0
      %1259 = vmatprep.subr.mxu0 0.0
      %1260 = vmatpush1.msra.mxu0 0.0
      %1261 = vmatprep.subr.mxu0 0.0
      %1262 = vmatpush1.msra.mxu0 0.0
      %1263 = vmatprep.subr.mxu0 0.0
      %1264 = vmatpush1.msra.mxu0 0.0
      %1265 = vmatprep.subr.mxu0 0.0
      %1266 = vmatpush1.msra.mxu0 0.0
      %1267 = vmatprep.subr.mxu0 0.0
      %1268 = vmatpush1.msra.mxu0 0.0
      %1269 = vmatprep.subr.mxu0 0.0
      %1270 = vmatpush1.msra.mxu0 0.0
      %1271 = vmatprep.subr.mxu0 0.0
      %1272 = vmatpush1.msra.mxu0 0.0
      %1273 = vmatprep.subr.mxu0 0.0
      %1274 = vmatpush1.msra.mxu0 0.0
      %1275 = vmatprep.subr.mxu0 0.0
      %1276 = vmatpush1.msra.mxu0 0.0
      %1277 = vmatprep.subr.mxu0 0.0
      %1278 = vmatpush1.msra.mxu0 0.0
      %1279 = vmatprep.mubr.f32.mxu0 0.0
      %1280 = vmatmul.mubr.f32.gmra.mrb[0].mxu0 %v1213
      %v1281 = vpop.f32.mrb[0].mxu0
      %v1282 = vadd.f32 0.0, %v1281
      %v1283 = vpop.f32.mrb[0].mxu0
      %v1284 = vadd.f32 0.0, %v1283
      %1285 = vdwg.mxu0
      %v1286 = vadd.f32 %v1206, %v1282
      %v1287 = vadd.f32 %v1208, %v1284
      %s1288 = scalar_lea.vmem %s2, 24
      %v1289 = vld [vmem:[%s1288] sm:$0xff]
      %v1291 = vsel %vm282, %v1289, 0
      %1293 = vmatprep.subr.mxu0 %v1040
      %1294 = vmatpush1.msra.mxu0 %v1039
      %1295 = vmatprep.subr.mxu0 0.0
      %1296 = vmatpush1.msra.mxu0 0.0
      %1297 = vmatprep.subr.mxu0 0.0
      %1298 = vmatpush1.msra.mxu0 0.0
      %1299 = vmatprep.subr.mxu0 0.0
      %1300 = vmatpush1.msra.mxu0 0.0
      %1301 = vmatprep.subr.mxu0 0.0
      %1302 = vmatpush1.msra.mxu0 0.0
      %1303 = vmatprep.subr.mxu0 0.0
      %1304 = vmatpush1.msra.mxu0 0.0
      %1305 = vmatprep.subr.mxu0 0.0
      %1306 = vmatpush1.msra.mxu0 0.0
      %1307 = vmatprep.subr.mxu0 0.0
      %1308 = vmatpush1.msra.mxu0 0.0
      %1309 = vmatprep.subr.mxu0 0.0
      %1310 = vmatpush1.msra.mxu0 0.0
      %1311 = vmatprep.subr.mxu0 0.0
      %1312 = vmatpush1.msra.mxu0 0.0
      %1313 = vmatprep.subr.mxu0 0.0
      %1314 = vmatpush1.msra.mxu0 0.0
      %1315 = vmatprep.subr.mxu0 0.0
      %1316 = vmatpush1.msra.mxu0 0.0
      %1317 = vmatprep.subr.mxu0 0.0
      %1318 = vmatpush1.msra.mxu0 0.0
      %1319 = vmatprep.subr.mxu0 0.0
      %1320 = vmatpush1.msra.mxu0 0.0
      %1321 = vmatprep.subr.mxu0 0.0
      %1322 = vmatpush1.msra.mxu0 0.0
      %1323 = vmatprep.subr.mxu0 0.0
      %1324 = vmatpush1.msra.mxu0 0.0
      %1325 = vmatprep.subr.mxu0 0.0
      %1326 = vmatpush1.msra.mxu0 0.0
      %1327 = vmatprep.subr.mxu0 0.0
      %1328 = vmatpush1.msra.mxu0 0.0
      %1329 = vmatprep.subr.mxu0 0.0
      %1330 = vmatpush1.msra.mxu0 0.0
      %1331 = vmatprep.subr.mxu0 0.0
      %1332 = vmatpush1.msra.mxu0 0.0
      %1333 = vmatprep.subr.mxu0 0.0
      %1334 = vmatpush1.msra.mxu0 0.0
      %1335 = vmatprep.subr.mxu0 0.0
      %1336 = vmatpush1.msra.mxu0 0.0
      %1337 = vmatprep.subr.mxu0 0.0
      %1338 = vmatpush1.msra.mxu0 0.0
      %1339 = vmatprep.subr.mxu0 0.0
      %1340 = vmatpush1.msra.mxu0 0.0
      %1341 = vmatprep.subr.mxu0 0.0
      %1342 = vmatpush1.msra.mxu0 0.0
      %1343 = vmatprep.subr.mxu0 0.0
      %1344 = vmatpush1.msra.mxu0 0.0
      %1345 = vmatprep.subr.mxu0 0.0
      %1346 = vmatpush1.msra.mxu0 0.0
      %1347 = vmatprep.subr.mxu0 0.0
      %1348 = vmatpush1.msra.mxu0 0.0
      %1349 = vmatprep.subr.mxu0 0.0
      %1350 = vmatpush1.msra.mxu0 0.0
      %1351 = vmatprep.subr.mxu0 0.0
      %1352 = vmatpush1.msra.mxu0 0.0
      %1353 = vmatprep.subr.mxu0 0.0
      %1354 = vmatpush1.msra.mxu0 0.0
      %1355 = vmatprep.subr.mxu0 0.0
      %1356 = vmatpush1.msra.mxu0 0.0
      %1357 = vmatprep.mubr.f32.mxu0 0.0
      %1358 = vmatmul.mubr.f32.gmra.mrb[0].mxu0 %v1291
      %v1359 = vpop.f32.mrb[0].mxu0
      %v1360 = vadd.f32 0.0, %v1359
      %v1361 = vpop.f32.mrb[0].mxu0
      %v1362 = vadd.f32 0.0, %v1361
      %1363 = vdwg.mxu0
      %v1364 = vadd.f32 %v1286, %v1360
      %v1365 = vadd.f32 %v1287, %v1362
      %s1366 = scalar_lea.vmem %s2, 32
      %v1367 = vld [vmem:[%s1366] sm:$0xff]
      %v1369 = vsel %vm282, %v1367, 0
      %1371 = vmatprep.subr.mxu0 %v994
      %1372 = vmatpush1.msra.mxu0 %v993
      %1373 = vmatprep.subr.mxu0 0.0
      %1374 = vmatpush1.msra.mxu0 0.0
      %1375 = vmatprep.subr.mxu0 0.0
      %1376 = vmatpush1.msra.mxu0 0.0
      %1377 = vmatprep.subr.mxu0 0.0
      %1378 = vmatpush1.msra.mxu0 0.0
      %1379 = vmatprep.subr.mxu0 0.0
      %1380 = vmatpush1.msra.mxu0 0.0
      %1381 = vmatprep.subr.mxu0 0.0
      %1382 = vmatpush1.msra.mxu0 0.0
      %1383 = vmatprep.subr.mxu0 0.0
      %1384 = vmatpush1.msra.mxu0 0.0
      %1385 = vmatprep.subr.mxu0 0.0
      %1386 = vmatpush1.msra.mxu0 0.0
      %1387 = vmatprep.subr.mxu0 0.0
      %1388 = vmatpush1.msra.mxu0 0.0
      %1389 = vmatprep.subr.mxu0 0.0
      %1390 = vmatpush1.msra.mxu0 0.0
      %1391 = vmatprep.subr.mxu0 0.0
      %1392 = vmatpush1.msra.mxu0 0.0
      %1393 = vmatprep.subr.mxu0 0.0
      %1394 = vmatpush1.msra.mxu0 0.0
      %1395 = vmatprep.subr.mxu0 0.0
      %1396 = vmatpush1.msra.mxu0 0.0
      %1397 = vmatprep.subr.mxu0 0.0
      %1398 = vmatpush1.msra.mxu0 0.0
      %1399 = vmatprep.subr.mxu0 0.0
      %1400 = vmatpush1.msra.mxu0 0.0
      %1401 = vmatprep.subr.mxu0 0.0
      %1402 = vmatpush1.msra.mxu0 0.0
      %1403 = vmatprep.subr.mxu0 0.0
      %1404 = vmatpush1.msra.mxu0 0.0
      %1405 = vmatprep.subr.mxu0 0.0
      %1406 = vmatpush1.msra.mxu0 0.0
      %1407 = vmatprep.subr.mxu0 0.0
      %1408 = vmatpush1.msra.mxu0 0.0
      %1409 = vmatprep.subr.mxu0 0.0
      %1410 = vmatpush1.msra.mxu0 0.0
      %1411 = vmatprep.subr.mxu0 0.0
      %1412 = vmatpush1.msra.mxu0 0.0
      %1413 = vmatprep.subr.mxu0 0.0
      %1414 = vmatpush1.msra.mxu0 0.0
      %1415 = vmatprep.subr.mxu0 0.0
      %1416 = vmatpush1.msra.mxu0 0.0
      %1417 = vmatprep.subr.mxu0 0.0
      %1418 = vmatpush1.msra.mxu0 0.0
      %1419 = vmatprep.subr.mxu0 0.0
      %1420 = vmatpush1.msra.mxu0 0.0
      %1421 = vmatprep.subr.mxu0 0.0
      %1422 = vmatpush1.msra.mxu0 0.0
      %1423 = vmatprep.subr.mxu0 0.0
      %1424 = vmatpush1.msra.mxu0 0.0
      %1425 = vmatprep.subr.mxu0 0.0
      %1426 = vmatpush1.msra.mxu0 0.0
      %1427 = vmatprep.subr.mxu0 0.0
      %1428 = vmatpush1.msra.mxu0 0.0
      %1429 = vmatprep.subr.mxu0 0.0
      %1430 = vmatpush1.msra.mxu0 0.0
      %1431 = vmatprep.subr.mxu0 0.0
      %1432 = vmatpush1.msra.mxu0 0.0
      %1433 = vmatprep.subr.mxu0 0.0
      %1434 = vmatpush1.msra.mxu0 0.0
      %1435 = vmatprep.mubr.f32.mxu0 0.0
      %1436 = vmatmul.mubr.f32.gmra.mrb[0].mxu0 %v1369
      %v1437 = vpop.f32.mrb[0].mxu0
      %v1438 = vadd.f32 0.0, %v1437
      %v1439 = vpop.f32.mrb[0].mxu0
      %v1440 = vadd.f32 0.0, %v1439
      %1441 = vdwg.mxu0
      %v1442 = vadd.f32 %v1364, %v1438
      %v1443 = vadd.f32 %v1365, %v1440
      %s1444 = scalar_lea.vmem %s2, 40
      %v1445 = vld [vmem:[%s1444] sm:$0xff]
      %v1447 = vsel %vm282, %v1445, 0
      %1449 = vmatprep.subr.mxu0 %v1042
      %1450 = vmatpush1.msra.mxu0 %v1041
      %1451 = vmatprep.subr.mxu0 0.0
      %1452 = vmatpush1.msra.mxu0 0.0
      %1453 = vmatprep.subr.mxu0 0.0
      %1454 = vmatpush1.msra.mxu0 0.0
      %1455 = vmatprep.subr.mxu0 0.0
      %1456 = vmatpush1.msra.mxu0 0.0
      %1457 = vmatprep.subr.mxu0 0.0
      %1458 = vmatpush1.msra.mxu0 0.0
      %1459 = vmatprep.subr.mxu0 0.0
      %1460 = vmatpush1.msra.mxu0 0.0
      %1461 = vmatprep.subr.mxu0 0.0
      %1462 = vmatpush1.msra.mxu0 0.0
      %1463 = vmatprep.subr.mxu0 0.0
      %1464 = vmatpush1.msra.mxu0 0.0
      %1465 = vmatprep.subr.mxu0 0.0
      %1466 = vmatpush1.msra.mxu0 0.0
      %1467 = vmatprep.subr.mxu0 0.0
      %1468 = vmatpush1.msra.mxu0 0.0
      %1469 = vmatprep.subr.mxu0 0.0
      %1470 = vmatpush1.msra.mxu0 0.0
      %1471 = vmatprep.subr.mxu0 0.0
      %1472 = vmatpush1.msra.mxu0 0.0
      %1473 = vmatprep.subr.mxu0 0.0
      %1474 = vmatpush1.msra.mxu0 0.0
      %1475 = vmatprep.subr.mxu0 0.0
      %1476 = vmatpush1.msra.mxu0 0.0
      %1477 = vmatprep.subr.mxu0 0.0
      %1478 = vmatpush1.msra.mxu0 0.0
      %1479 = vmatprep.subr.mxu0 0.0
      %1480 = vmatpush1.msra.mxu0 0.0
      %1481 = vmatprep.subr.mxu0 0.0
      %1482 = vmatpush1.msra.mxu0 0.0
      %1483 = vmatprep.subr.mxu0 0.0
      %1484 = vmatpush1.msra.mxu0 0.0
      %1485 = vmatprep.subr.mxu0 0.0
      %1486 = vmatpush1.msra.mxu0 0.0
      %1487 = vmatprep.subr.mxu0 0.0
      %1488 = vmatpush1.msra.mxu0 0.0
      %1489 = vmatprep.subr.mxu0 0.0
      %1490 = vmatpush1.msra.mxu0 0.0
      %1491 = vmatprep.subr.mxu0 0.0
      %1492 = vmatpush1.msra.mxu0 0.0
      %1493 = vmatprep.subr.mxu0 0.0
      %1494 = vmatpush1.msra.mxu0 0.0
      %1495 = vmatprep.subr.mxu0 0.0
      %1496 = vmatpush1.msra.mxu0 0.0
      %1497 = vmatprep.subr.mxu0 0.0
      %1498 = vmatpush1.msra.mxu0 0.0
      %1499 = vmatprep.subr.mxu0 0.0
      %1500 = vmatpush1.msra.mxu0 0.0
      %1501 = vmatprep.subr.mxu0 0.0
      %1502 = vmatpush1.msra.mxu0 0.0
      %1503 = vmatprep.subr.mxu0 0.0
      %1504 = vmatpush1.msra.mxu0 0.0
      %1505 = vmatprep.subr.mxu0 0.0
      %1506 = vmatpush1.msra.mxu0 0.0
      %1507 = vmatprep.subr.mxu0 0.0
      %1508 = vmatpush1.msra.mxu0 0.0
      %1509 = vmatprep.subr.mxu0 0.0
      %1510 = vmatpush1.msra.mxu0 0.0
      %1511 = vmatprep.subr.mxu0 0.0
      %1512 = vmatpush1.msra.mxu0 0.0
      %1513 = vmatprep.mubr.f32.mxu0 0.0
      %1514 = vmatmul.mubr.f32.gmra.mrb[0].mxu0 %v1447
      %v1515 = vpop.f32.mrb[0].mxu0
      %v1516 = vadd.f32 0.0, %v1515
      %v1517 = vpop.f32.mrb[0].mxu0
      %v1518 = vadd.f32 0.0, %v1517
      %1519 = vdwg.mxu0
      %v1520 = vadd.f32 %v1442, %v1516
      %v1521 = vadd.f32 %v1443, %v1518
      %s1522 = scalar_lea.vmem %s2, 48
      %v1523 = vld [vmem:[%s1522] sm:$0xff]
      %v1525 = vsel %vm282, %v1523, 0
      %1527 = vmatprep.subr.mxu0 %v1056
      %1528 = vmatpush1.msra.mxu0 %v1055
      %1529 = vmatprep.subr.mxu0 0.0
      %1530 = vmatpush1.msra.mxu0 0.0
      %1531 = vmatprep.subr.mxu0 0.0
      %1532 = vmatpush1.msra.mxu0 0.0
      %1533 = vmatprep.subr.mxu0 0.0
      %1534 = vmatpush1.msra.mxu0 0.0
      %1535 = vmatprep.subr.mxu0 0.0
      %1536 = vmatpush1.msra.mxu0 0.0
      %1537 = vmatprep.subr.mxu0 0.0
      %1538 = vmatpush1.msra.mxu0 0.0
      %1539 = vmatprep.subr.mxu0 0.0
      %1540 = vmatpush1.msra.mxu0 0.0
      %1541 = vmatprep.subr.mxu0 0.0
      %1542 = vmatpush1.msra.mxu0 0.0
      %1543 = vmatprep.subr.mxu0 0.0
      %1544 = vmatpush1.msra.mxu0 0.0
      %1545 = vmatprep.subr.mxu0 0.0
      %1546 = vmatpush1.msra.mxu0 0.0
      %1547 = vmatprep.subr.mxu0 0.0
      %1548 = vmatpush1.msra.mxu0 0.0
      %1549 = vmatprep.subr.mxu0 0.0
      %1550 = vmatpush1.msra.mxu0 0.0
      %1551 = vmatprep.subr.mxu0 0.0
      %1552 = vmatpush1.msra.mxu0 0.0
      %1553 = vmatprep.subr.mxu0 0.0
      %1554 = vmatpush1.msra.mxu0 0.0
      %1555 = vmatprep.subr.mxu0 0.0
      %1556 = vmatpush1.msra.mxu0 0.0
      %1557 = vmatprep.subr.mxu0 0.0
      %1558 = vmatpush1.msra.mxu0 0.0
      %1559 = vmatprep.subr.mxu0 0.0
      %1560 = vmatpush1.msra.mxu0 0.0
      %1561 = vmatprep.subr.mxu0 0.0
      %1562 = vmatpush1.msra.mxu0 0.0
      %1563 = vmatprep.subr.mxu0 0.0
      %1564 = vmatpush1.msra.mxu0 0.0
      %1565 = vmatprep.subr.mxu0 0.0
      %1566 = vmatpush1.msra.mxu0 0.0
      %1567 = vmatprep.subr.mxu0 0.0
      %1568 = vmatpush1.msra.mxu0 0.0
      %1569 = vmatprep.subr.mxu0 0.0
      %1570 = vmatpush1.msra.mxu0 0.0
      %1571 = vmatprep.subr.mxu0 0.0
      %1572 = vmatpush1.msra.mxu0 0.0
      %1573 = vmatprep.subr.mxu0 0.0
      %1574 = vmatpush1.msra.mxu0 0.0
      %1575 = vmatprep.subr.mxu0 0.0
      %1576 = vmatpush1.msra.mxu0 0.0
      %1577 = vmatprep.subr.mxu0 0.0
      %1578 = vmatpush1.msra.mxu0 0.0
      %1579 = vmatprep.subr.mxu0 0.0
      %1580 = vmatpush1.msra.mxu0 0.0
      %1581 = vmatprep.subr.mxu0 0.0
      %1582 = vmatpush1.msra.mxu0 0.0
      %1583 = vmatprep.subr.mxu0 0.0
      %1584 = vmatpush1.msra.mxu0 0.0
      %1585 = vmatprep.subr.mxu0 0.0
      %1586 = vmatpush1.msra.mxu0 0.0
      %1587 = vmatprep.subr.mxu0 0.0
      %1588 = vmatpush1.msra.mxu0 0.0
      %1589 = vmatprep.subr.mxu0 0.0
      %1590 = vmatpush1.msra.mxu0 0.0
      %1591 = vmatprep.mubr.f32.mxu0 0.0
      %1592 = vmatmul.mubr.f32.gmra.mrb[0].mxu0 %v1525
      %v1593 = vpop.f32.mrb[0].mxu0
      %v1594 = vadd.f32 0.0, %v1593
      %v1595 = vpop.f32.mrb[0].mxu0
      %v1596 = vadd.f32 0.0, %v1595
      %1597 = vdwg.mxu0
      %v1598 = vadd.f32 %v1520, %v1594
      %v1599 = vadd.f32 %v1521, %v1596
      %s1600 = scalar_lea.vmem %s2, 56
      %v1601 = vld [vmem:[%s1600] sm:$0xff]
      %v1603 = vsel %vm282, %v1601, 0
      %1605 = vmatprep.subr.mxu0 %v1010
      %1606 = vmatpush1.msra.mxu0 %v1009
      %1607 = vmatprep.subr.mxu0 0.0
      %1608 = vmatpush1.msra.mxu0 0.0
      %1609 = vmatprep.subr.mxu0 0.0
      %1610 = vmatpush1.msra.mxu0 0.0
      %1611 = vmatprep.subr.mxu0 0.0
      %1612 = vmatpush1.msra.mxu0 0.0
      %1613 = vmatprep.subr.mxu0 0.0
      %1614 = vmatpush1.msra.mxu0 0.0
      %1615 = vmatprep.subr.mxu0 0.0
      %1616 = vmatpush1.msra.mxu0 0.0
      %1617 = vmatprep.subr.mxu0 0.0
      %1618 = vmatpush1.msra.mxu0 0.0
      %1619 = vmatprep.subr.mxu0 0.0
      %1620 = vmatpush1.msra.mxu0 0.0
      %1621 = vmatprep.subr.mxu0 0.0
      %1622 = vmatpush1.msra.mxu0 0.0
      %1623 = vmatprep.subr.mxu0 0.0
      %1624 = vmatpush1.msra.mxu0 0.0
      %1625 = vmatprep.subr.mxu0 0.0
      %1626 = vmatpush1.msra.mxu0 0.0
      %1627 = vmatprep.subr.mxu0 0.0
      %1628 = vmatpush1.msra.mxu0 0.0
      %1629 = vmatprep.subr.mxu0 0.0
      %1630 = vmatpush1.msra.mxu0 0.0
      %1631 = vmatprep.subr.mxu0 0.0
      %1632 = vmatpush1.msra.mxu0 0.0
      %1633 = vmatprep.subr.mxu0 0.0
      %1634 = vmatpush1.msra.mxu0 0.0
      %1635 = vmatprep.subr.mxu0 0.0
      %1636 = vmatpush1.msra.mxu0 0.0
      %1637 = vmatprep.subr.mxu0 0.0
      %1638 = vmatpush1.msra.mxu0 0.0
      %1639 = vmatprep.subr.mxu0 0.0
      %1640 = vmatpush1.msra.mxu0 0.0
      %1641 = vmatprep.subr.mxu0 0.0
      %1642 = vmatpush1.msra.mxu0 0.0
      %1643 = vmatprep.subr.mxu0 0.0
      %1644 = vmatpush1.msra.mxu0 0.0
      %1645 = vmatprep.subr.mxu0 0.0
      %1646 = vmatpush1.msra.mxu0 0.0
      %1647 = vmatprep.subr.mxu0 0.0
      %1648 = vmatpush1.msra.mxu0 0.0
      %1649 = vmatprep.subr.mxu0 0.0
      %1650 = vmatpush1.msra.mxu0 0.0
      %1651 = vmatprep.subr.mxu0 0.0
      %1652 = vmatpush1.msra.mxu0 0.0
      %1653 = vmatprep.subr.mxu0 0.0
      %1654 = vmatpush1.msra.mxu0 0.0
      %1655 = vmatprep.subr.mxu0 0.0
      %1656 = vmatpush1.msra.mxu0 0.0
      %1657 = vmatprep.subr.mxu0 0.0
      %1658 = vmatpush1.msra.mxu0 0.0
      %1659 = vmatprep.subr.mxu0 0.0
      %1660 = vmatpush1.msra.mxu0 0.0
      %1661 = vmatprep.subr.mxu0 0.0
      %1662 = vmatpush1.msra.mxu0 0.0
      %1663 = vmatprep.subr.mxu0 0.0
      %1664 = vmatpush1.msra.mxu0 0.0
      %1665 = vmatprep.subr.mxu0 0.0
      %1666 = vmatpush1.msra.mxu0 0.0
      %1667 = vmatprep.subr.mxu0 0.0
      %1668 = vmatpush1.msra.mxu0 0.0
      %1669 = vmatprep.mubr.f32.mxu0 0.0
      %1670 = vmatmul.mubr.f32.gmra.mrb[0].mxu0 %v1603
      %v1671 = vpop.f32.mrb[0].mxu0
      %v1672 = vadd.f32 0.0, %v1671
      %v1673 = vpop.f32.mrb[0].mxu0
      %v1674 = vadd.f32 0.0, %v1673
      %1675 = vdwg.mxu0
      %v1676 = vadd.f32 %v1598, %v1672
      %v1677 = vadd.f32 %v1599, %v1674
      %s1678 = scalar_lea.vmem %s2, 64
      %v1679 = vld [vmem:[%s1678] sm:$0xff]
      %v1681 = vsel %vm282, %v1679, 0
      %1683 = vmatprep.subr.mxu0 %v1058
      %1684 = vmatpush1.msra.mxu0 %v1057
      %1685 = vmatprep.subr.mxu0 0.0
      %1686 = vmatpush1.msra.mxu0 0.0
      %1687 = vmatprep.subr.mxu0 0.0
      %1688 = vmatpush1.msra.mxu0 0.0
      %1689 = vmatprep.subr.mxu0 0.0
      %1690 = vmatpush1.msra.mxu0 0.0
      %1691 = vmatprep.subr.mxu0 0.0
      %1692 = vmatpush1.msra.mxu0 0.0
      %1693 = vmatprep.subr.mxu0 0.0
      %1694 = vmatpush1.msra.mxu0 0.0
      %1695 = vmatprep.subr.mxu0 0.0
      %1696 = vmatpush1.msra.mxu0 0.0
      %1697 = vmatprep.subr.mxu0 0.0
      %1698 = vmatpush1.msra.mxu0 0.0
      %1699 = vmatprep.subr.mxu0 0.0
      %1700 = vmatpush1.msra.mxu0 0.0
      %1701 = vmatprep.subr.mxu0 0.0
      %1702 = vmatpush1.msra.mxu0 0.0
      %1703 = vmatprep.subr.mxu0 0.0
      %1704 = vmatpush1.msra.mxu0 0.0
      %1705 = vmatprep.subr.mxu0 0.0
      %1706 = vmatpush1.msra.mxu0 0.0
      %1707 = vmatprep.subr.mxu0 0.0
      %1708 = vmatpush1.msra.mxu0 0.0
      %1709 = vmatprep.subr.mxu0 0.0
      %1710 = vmatpush1.msra.mxu0 0.0
      %1711 = vmatprep.subr.mxu0 0.0
      %1712 = vmatpush1.msra.mxu0 0.0
      %1713 = vmatprep.subr.mxu0 0.0
      %1714 = vmatpush1.msra.mxu0 0.0
      %1715 = vmatprep.subr.mxu0 0.0
      %1716 = vmatpush1.msra.mxu0 0.0
      %1717 = vmatprep.subr.mxu0 0.0
      %1718 = vmatpush1.msra.mxu0 0.0
      %1719 = vmatprep.subr.mxu0 0.0
      %1720 = vmatpush1.msra.mxu0 0.0
      %1721 = vmatprep.subr.mxu0 0.0
      %1722 = vmatpush1.msra.mxu0 0.0
      %1723 = vmatprep.subr.mxu0 0.0
      %1724 = vmatpush1.msra.mxu0 0.0
      %1725 = vmatprep.subr.mxu0 0.0
      %1726 = vmatpush1.msra.mxu0 0.0
      %1727 = vmatprep.subr.mxu0 0.0
      %1728 = vmatpush1.msra.mxu0 0.0
      %1729 = vmatprep.subr.mxu0 0.0
      %1730 = vmatpush1.msra.mxu0 0.0
      %1731 = vmatprep.subr.mxu0 0.0
      %1732 = vmatpush1.msra.mxu0 0.0
      %1733 = vmatprep.subr.mxu0 0.0
      %1734 = vmatpush1.msra.mxu0 0.0
      %1735 = vmatprep.subr.mxu0 0.0
      %1736 = vmatpush1.msra.mxu0 0.0
      %1737 = vmatprep.subr.mxu0 0.0
      %1738 = vmatpush1.msra.mxu0 0.0
      %1739 = vmatprep.subr.mxu0 0.0
      %1740 = vmatpush1.msra.mxu0 0.0
      %1741 = vmatprep.subr.mxu0 0.0
      %1742 = vmatpush1.msra.mxu0 0.0
      %1743 = vmatprep.subr.mxu0 0.0
      %1744 = vmatpush1.msra.mxu0 0.0
      %1745 = vmatprep.subr.mxu0 0.0
      %1746 = vmatpush1.msra.mxu0 0.0
      %1747 = vmatprep.mubr.f32.mxu0 0.0
      %1748 = vmatmul.mubr.f32.gmra.mrb[0].mxu0 %v1681
      %v1749 = vpop.f32.mrb[0].mxu0
      %v1750 = vadd.f32 0.0, %v1749
      %v1751 = vpop.f32.mrb[0].mxu0
      %v1752 = vadd.f32 0.0, %v1751
      %1753 = vdwg.mxu0
      %v1754 = vadd.f32 %v1676, %v1750
      %v1755 = vadd.f32 %v1677, %v1752
      %v1756 = vadd.f32 %v1754, %v1755
      %1757 = vadd.xlane.f32.xlu0 %v1756
      %v1758 = vpop.xlane.xlu0 %1757
      %v1759 = vmul.f32 %v1758, 0.00390625
      %v1760 = vsub.f32 %v1754, %v1759
      %v1761 = vsub.f32 %v1755, %v1759
      %v1762 = vmul.f32 %v1760, %v1760
      %v1763 = vmul.f32 %v1761, %v1761
      %v1764 = vadd.f32 %v1762, %v1763
      %1765 = vadd.xlane.f32.xlu0 %v1764
      %v1766 = vpop.xlane.xlu0 %1765
      %v1767 = vmul.f32 %v1766, 0.00390625
      %v1768 = vadd.f32 %v1767, 1e-05
      %v1769 = vrsqrt.pop %v1768
      %v1770 = vmul.f32 %v1760, %v1769
      %v1771 = vmul.f32 %v1761, %v1769
      %v1772 = vadd.f32 %v171, %v1770
      %v1773 = vadd.f32 %v172, %v1771
      %1774 = vst [vmem:[%s170] sm:$0xff] %v1772
      %1775 = vst [vmem:[%s170 + $0x8] sm:$0xff] %v1773
      %p1776 = scmp.lt.s32.totalorder %s14, 1
      %s1777 = scalar_select %p1776, %s14, 1
      %s1778 = smul.addr %s1777, 2
      %s1779 = smul.addr %s1778, 8
      %s1780 = scalar_lea.vmem %s3, %s1779
      // Predicated region
      $region33: #{residual_block_forward.1} parent=31 // pred_check
        %p1781 = pneg %p100
      $region34: #{residual_block_forward.1} parent=31 // pred_check_branch
        %1783 = sbr.rel (%p1781) target = $region36
      $region35: #{residual_block_forward.1} parent=31 // pred_region
        _
      $region36: #{residual_block_forward.1} parent=31 // pred_fallthru
        _
    $region32: #{residual_block_forward.1} parent=5 // pred_fallthru
      _
    %p1784 = scmp.le.s32.totalorder 2, %s9
    // Predicated region
    $region37: #{residual_block_forward.1} parent=5 // pred_check
      %p1785 = pneg %p1784
    $region38: #{residual_block_forward.1} parent=5 // pred_check_branch
      %1787 = sbr.rel (%p1785) target = $region40
    $region39: #{residual_block_forward.1} parent=5 // pred_region
      %s1788 = ssub.s32 %s9, 2
      // Predicated region
      $region41: #{residual_block_forward.1} parent=39 // pred_check
        %p1789 = pneg %p106
      $region42: #{residual_block_forward.1} parent=39 // pred_check_branch
        %1791 = sbr.rel (%p1789) target = $region44
      $region43: #{residual_block_forward.1} parent=39 // pred_region
        %p1792 = scmp.lt.s32.totalorder %s15, 1
        %s1793 = scalar_select %p1792, %s15, 1
        %s1794 = smul.addr %s1793, 2
        %s1795 = smul.addr %s1794, 8
        %s1796 = scalar_lea.vmem %s3, %s1795
      $region44: #{residual_block_forward.1} parent=39 // pred_fallthru
        _
    $region40: #{residual_block_forward.1} parent=5 // pred_fallthru
      _
  $region6: #{residual_block_forward.1} parent=0 // loop_footer
    %s13 = sadd.s32 1, %s9
  $region7: #{residual_block_forward.1} parent=0 // loop_footer_branch
    %8 = sbr.rel target = $region3
  $region8: #{residual_block_forward.1} parent=0 // loop_exit
    _

</llo_original>
